<compile_context>
chip_gen: v7x
topology: tpu7x:2x2x1
jax: 0.10.0
libtpu: 0.0.40
codegen_flags: <defaults>
</compile_context>

<pallas_src>
import jax
import jax.numpy as jnp
from jax.experimental import pallas as pl
from jax.experimental.pallas import tpu as pltpu


def _ceil_to(x, n):
    return ((x + n - 1) // n) * n


def _out_channel_counts(feat_map_dim, split_half):
    counts = []
    n = len(feat_map_dim)
    for i, dim in enumerate(feat_map_dim):
        if split_half and i != n - 1:
            counts.append(dim // 2)
        else:
            counts.append(dim)
    return tuple(counts)


def _link_dims(m, feat_map_dim, split_half):
    """H_{i-1} (input feature-map count) for every layer i."""
    dims = [m]
    n = len(feat_map_dim)
    for i, dim in enumerate(feat_map_dim):
        dims.append(dim // 2 if (split_half and i != n - 1) else dim)
    return dims[:-1]


def _pick_d_chunk(D, m, feat_map_dim, split_half, tb, itemsize, budget_bytes):
    """Largest divisor of D such that the z intermediate fits the VMEM budget."""
    z_rows = max(h * m for h in _link_dims(m, feat_map_dim, split_half))
    for dc in range(D, 0, -1):
        if D % dc:
            continue
        if z_rows * dc * tb * itemsize <= budget_bytes:
            return dc
    return 1


def make_cin_kernel(m, D, tb, d_chunk, feat_map_dim, split_half, compute_dtype):
    n_layers = len(feat_map_dim)
    n_chunks = D // d_chunk
    lanes = d_chunk * tb
    out_counts = _out_channel_counts(feat_map_dim, split_half)
    pad_counts = tuple(_ceil_to(c, 8) for c in out_counts)

    def kernel(x_ref, *refs):
        w_refs = refs[0:2 * n_layers:2]
        b_refs = refs[1:2 * n_layers:2]
        out_ref = refs[2 * n_layers]

        def sum_over_d(a):
            # (rows, d_chunk*tb) -> (rows, tb); static 128-aligned lane slices,
            # cheap vreg selects + VPU adds.
            acc = a[:, 0:tb]
            for q in range(1, d_chunk):
                acc = acc + a[:, q * tb:(q + 1) * tb]
            return acc

        acc_parts = [None] * n_layers

        # Static (fully unrolled) loop over embedding chunks: the 1x1 conv only
        # mixes channels, never d, so chunks are independent.
        for c in range(n_chunks):
            x0 = x_ref[:, c * lanes:(c + 1) * lanes]          # (m, lanes) f32
            prev = x0
            for i, dim in enumerate(feat_map_dim):
                hp = prev.shape[0]
                # Outer product over channel pairs (VPU), lanes carry (d, batch):
                #   z[j*m + k, :] = prev[j, :] * x0[k, :]
                z = (prev[:, None, :] * x0[None, :, :]).reshape(hp * m, lanes)
                # 1x1 Conv1d == channel matmul; one MXU call with N = lanes.
                y = jnp.dot(w_refs[i][...], z.astype(compute_dtype),
                            preferred_element_type=jnp.float32)  # (dim, lanes)
                bias = b_refs[i][...]                            # (dim, 1) f32
                if split_half and i != n_layers - 1:
                    half = dim // 2
                    out_rows = y[half:]
                    # The chained half needs its bias per-d before the next
                    # outer product; the output half's bias is hoisted below.
                    prev = y[:half] + bias[:half]
                else:
                    out_rows = y
                    if i != n_layers - 1:
                        prev = y + bias
                part = sum_over_d(out_rows)                      # (c_i, tb)
                acc_parts[i] = part if acc_parts[i] is None else acc_parts[i] + part

        # Hoisted output bias (added at every d in the reference, so D * bias
        # after the d-sum), pad rows to sublane multiples of 8, single
        # unmasked lane-dense store.
        pieces = []
        for i, (cnt, pcnt) in enumerate(zip(out_counts, pad_counts)):
            bias = b_refs[i][...]
            if split_half and i != n_layers - 1:
                b_rows = bias[feat_map_dim[i] // 2:]
            else:
                b_rows = bias
            piece = acc_parts[i] + float(D) * b_rows
            if pcnt != cnt:
                piece = jnp.concatenate(
                    [piece, jnp.zeros((pcnt - cnt, tb), piece.dtype)], axis=0)
            pieces.append(piece)
        out_ref[...] = jnp.concatenate(pieces, axis=0).astype(out_ref.dtype)
        # TODO(synk): activation other than None (linear, the paper default) is
        # not implemented; a nonlinearity would also invalidate the bias hoist.

    return kernel


def cin_forward_pallas(x, weights, biases, feat_map_dim, split_half,
                       *, tb=128, compute_dtype=jnp.bfloat16,
                       z_vmem_budget=4 * 1024 * 1024):
    B, m, D = x.shape
    n_layers = len(feat_map_dim)
    if split_half:
        for dim in feat_map_dim[:-1]:
            assert dim % 2 == 0, (
                "split_half=True requires even feat_map_dim (except last layer)")

    out_counts = _out_channel_counts(feat_map_dim, split_half)
    pad_counts = tuple(_ceil_to(c, 8) for c in out_counts)
    total_out = sum(out_counts)
    padded_total = sum(pad_counts)

    b_pad = _ceil_to(B, tb)
    nbt = b_pad // tb

    cdt = jnp.dtype(compute_dtype)
    d_chunk = _pick_d_chunk(D, m, feat_map_dim, split_half, tb,
                            cdt.itemsize, z_vmem_budget)

    # Layout plumbing: lanes carry (d, batch-within-tile) pairs, channels sit on
    # sublanes -> per batch tile the kernel reads one lane-dense (m, D*tb) slab.
    # TODO(synk): for production batch sizes produce x in this layout upstream
    # (or fuse the relayout into the kernel) to avoid this extra HBM round trip.
    x_p = x if b_pad == B else jnp.pad(x, ((0, b_pad - B), (0, 0), (0, 0)))
    x_r = (x_p.reshape(nbt, tb, m, D)
              .transpose(0, 2, 3, 1)
              .reshape(nbt, m, D * tb)
              .astype(jnp.float32))

    w_args = [w.astype(compute_dtype) for w in weights]       # bf16 MXU operands
    b_args = [b.astype(jnp.float32).reshape(-1, 1) for b in biases]

    kernel = make_cin_kernel(m, D, tb, d_chunk, tuple(feat_map_dim),
                             split_half, compute_dtype)

    in_specs = [pl.BlockSpec((pl.Squeezed(), m, D * tb), lambda b: (b, 0, 0))]
    args = [x_r]
    for w, bias in zip(w_args, b_args):
        in_specs.append(pl.BlockSpec(w.shape, lambda b: (0, 0)))    # resident
        in_specs.append(pl.BlockSpec(bias.shape, lambda b: (0, 0)))
        args.append(w)
        args.append(bias)

    # Cost hint for XLA scheduling around the custom call.
    h_in = _link_dims(m, feat_map_dim, split_half)
    flops = sum(b_pad * D * (2 * dim + 1) * h * m
                for dim, h in zip(feat_map_dim, h_in))
    bytes_accessed = (x_r.size * x_r.dtype.itemsize
                      + sum(w.size * w.dtype.itemsize for w in w_args)
                      + sum(b.size * b.dtype.itemsize for b in b_args)
                      + padded_total * b_pad * 4)
    cost = pl.CostEstimate(flops=flops, transcendentals=0,
                           bytes_accessed=bytes_accessed)

    out_padded = pl.pallas_call(
        kernel,
        out_shape=jax.ShapeDtypeStruct((padded_total, b_pad), jnp.float32),
        grid=(nbt,),                                   # batch tiles only
        in_specs=in_specs,
        out_specs=pl.BlockSpec((padded_total, tb), lambda b: (0, b)),
        compiler_params=pltpu.CompilerParams(
            dimension_semantics=("parallel",)),        # >=2 blocks feed v7x TCs
        cost_estimate=cost,
    )(*args)

    # Strip per-layer sublane padding, drop batch padding, back to (B, total_out).
    row_pieces = []
    off = 0
    for cnt, pcnt in zip(out_counts, pad_counts):
        row_pieces.append(out_padded[off:off + cnt])
        off += pcnt
    out_t = (row_pieces[0] if len(row_pieces) == 1
             else jnp.concatenate(row_pieces, axis=0))   # (total_out, b_pad)
    assert out_t.shape[0] == total_out
    return out_t[:, :B].T


def cin_forward_ref(x, weights, biases, feat_map_dim, split_half):
    """Pure-JAX reference mirroring the PyTorch forward exactly."""
    B, m, D = x.shape
    n_layers = len(feat_map_dim)
    prev = x
    outs = []
    for i, dim in enumerate(feat_map_dim):
        hp = prev.shape[1]
        z = jnp.einsum('ijk,izk->ijzk', prev, x).reshape(B, hp * m, D)
        y = jnp.einsum('cp,bpd->bcd', weights[i], z) + biases[i].reshape(1, dim, 1)
        if split_half and i != n_layers - 1:
            prev, out = y[:, :dim // 2], y[:, dim // 2:]
        else:
            prev, out = y, y
        outs.append(out)
    return jnp.sum(jnp.concatenate(outs, axis=1), axis=2)


if __name__ == "__main__":
    # Shapes consistent with the module:
    #   input_dim = (n_feature=8, embedding_dim=16), feat_map_dim=(8, 8),
    #   split_half=True.  B=256 gives two 128-wide batch-lane tiles (keeps both
    #   v7x TensorCores busy on the parallel grid axis).
    B = 256
    n_feature = 8
    embedding_dim = 16
    feat_map_dim = (8, 8)
    split_half = True

    key = jax.random.PRNGKey(0)
    kx, *kws = jax.random.split(key, 1 + 2 * len(feat_map_dim))
    x = jax.random.normal(kx, (B, n_feature, embedding_dim), dtype=jnp.float32)

    # Deterministic Conv1d parameters (weight (dim, in_ch, 1) squeezed to (dim, in_ch)).
    weights, biases = [], []
    link = n_feature
    for i, dim in enumerate(feat_map_dim):
        in_ch = link * n_feature
        weights.append(0.1 * jax.random.normal(kws[2 * i], (dim, in_ch), jnp.float32))
        biases.append(0.1 * jax.random.normal(kws[2 * i + 1], (dim, 1), jnp.float32))
        link = dim // 2 if (split_half and i != len(feat_map_dim) - 1) else dim

    out = cin_forward_pallas(x, weights, biases, feat_map_dim, split_half, tb=128)
    out = jax.block_until_ready(out)

    ref = cin_forward_ref(x, weights, biases, feat_map_dim, split_half)
    assert out.shape == ref.shape, (out.shape, ref.shape)
    # bf16 MXU operands (f32 accumulation) -> bf16-level tolerance.
    max_err = float(jnp.max(jnp.abs(out - ref)))
    assert jnp.allclose(out, ref, atol=5e-2, rtol=5e-2), max_err
    print("KERNEL_OK")
</pallas_src>

<mosaic_0001>
module attributes {stable_mosaic.version = 11 : i64} {
  func.func @kernel(%arg0: i32, %arg1: memref<1x8x2048xf32, #tpu.memory_space<vmem>>, %arg2: memref<8x64xbf16, #tpu.memory_space<vmem>>, %arg3: memref<8x1xf32, #tpu.memory_space<vmem>>, %arg4: memref<8x32xbf16, #tpu.memory_space<vmem>>, %arg5: memref<8x1xf32, #tpu.memory_space<vmem>>, %arg6: memref<16x128xf32, #tpu.memory_space<vmem>>) attributes {dimension_semantics = [#tpu.dimension_semantics<parallel>], iteration_bounds = array<i64: 2>, scalar_prefetch = 0 : i64, scratch_operands = 0 : i64, tpu.core_type = #tpu.core_type<tc>, window_params = [{transform_indices = @transform_0, window_bounds = array<i64: 1, 8, 2048>}, {pipeline_mode = #tpu.pipeline_mode<synchronous>, transform_indices = @transform_1, window_bounds = array<i64: 8, 64>}, {pipeline_mode = #tpu.pipeline_mode<synchronous>, transform_indices = @transform_2, window_bounds = array<i64: 8, 1>}, {pipeline_mode = #tpu.pipeline_mode<synchronous>, transform_indices = @transform_3, window_bounds = array<i64: 8, 32>}, {pipeline_mode = #tpu.pipeline_mode<synchronous>, transform_indices = @transform_4, window_bounds = array<i64: 8, 1>}, {transform_indices = @transform_5, window_bounds = array<i64: 16, 128>}]} {
    %c0 = arith.constant 0 : index
    %c0_0 = arith.constant 0 : index
    %c0_1 = arith.constant 0 : index
    %0 = vector.load %arg1[%c0, %c0_0, %c0_1] : memref<1x8x2048xf32, #tpu.memory_space<vmem>>, vector<1x8x2048xf32>
    %1 = vector.shape_cast %0 : vector<1x8x2048xf32> to vector<8x2048xf32>
    %2 = vector.shape_cast %1 : vector<8x2048xf32> to vector<8x1x2048xf32>
    %3 = vector.shape_cast %1 : vector<8x2048xf32> to vector<1x8x2048xf32>
    %4 = vector.broadcast %2 : vector<8x1x2048xf32> to vector<8x8x2048xf32>
    %5 = vector.broadcast %3 : vector<1x8x2048xf32> to vector<8x8x2048xf32>
    %6 = arith.mulf %4, %5 : vector<8x8x2048xf32>
    %7 = vector.shape_cast %6 : vector<8x8x2048xf32> to vector<64x2048xf32>
    %c0_2 = arith.constant 0 : index
    %c0_3 = arith.constant 0 : index
    %8 = vector.load %arg2[%c0_2, %c0_3] : memref<8x64xbf16, #tpu.memory_space<vmem>>, vector<8x64xbf16>
    %9 = arith.truncf %7 : vector<64x2048xf32> to vector<64x2048xbf16>
    %cst = arith.constant dense<0.000000e+00> : vector<8x2048xf32>
    %10 = tpu.matmul %8, %9, %cst {dimension_numbers = #tpu.dot_dimension_numbers<[1], [0], [0], [1], [0, 0, 1, 1], [], []>} : vector<8x64xbf16>, vector<64x2048xbf16>, vector<8x2048xf32> -> vector<8x2048xf32>
    %c0_4 = arith.constant 0 : index
    %c0_5 = arith.constant 0 : index
    %11 = vector.load %arg3[%c0_4, %c0_5] : memref<8x1xf32, #tpu.memory_space<vmem>>, vector<8x1xf32>
    %12 = vector.extract_strided_slice %10 {offsets = [4, 0], sizes = [4, 2048], strides = [1, 1]} : vector<8x2048xf32> to vector<4x2048xf32>
    %13 = vector.extract_strided_slice %10 {offsets = [0, 0], sizes = [4, 2048], strides = [1, 1]} : vector<8x2048xf32> to vector<4x2048xf32>
    %14 = vector.extract_strided_slice %11 {offsets = [0, 0], sizes = [4, 1], strides = [1, 1]} : vector<8x1xf32> to vector<4x1xf32>
    %15 = vector.broadcast %14 : vector<4x1xf32> to vector<4x2048xf32>
    %16 = arith.addf %13, %15 : vector<4x2048xf32>
    %17 = vector.extract_strided_slice %12 {offsets = [0, 0], sizes = [4, 128], strides = [1, 1]} : vector<4x2048xf32> to vector<4x128xf32>
    %18 = vector.extract_strided_slice %12 {offsets = [0, 128], sizes = [4, 128], strides = [1, 1]} : vector<4x2048xf32> to vector<4x128xf32>
    %19 = arith.addf %17, %18 : vector<4x128xf32>
    %20 = vector.extract_strided_slice %12 {offsets = [0, 256], sizes = [4, 128], strides = [1, 1]} : vector<4x2048xf32> to vector<4x128xf32>
    %21 = arith.addf %19, %20 : vector<4x128xf32>
    %22 = vector.extract_strided_slice %12 {offsets = [0, 384], sizes = [4, 128], strides = [1, 1]} : vector<4x2048xf32> to vector<4x128xf32>
    %23 = arith.addf %21, %22 : vector<4x128xf32>
    %24 = vector.extract_strided_slice %12 {offsets = [0, 512], sizes = [4, 128], strides = [1, 1]} : vector<4x2048xf32> to vector<4x128xf32>
    %25 = arith.addf %23, %24 : vector<4x128xf32>
    %26 = vector.extract_strided_slice %12 {offsets = [0, 640], sizes = [4, 128], strides = [1, 1]} : vector<4x2048xf32> to vector<4x128xf32>
    %27 = arith.addf %25, %26 : vector<4x128xf32>
    %28 = vector.extract_strided_slice %12 {offsets = [0, 768], sizes = [4, 128], strides = [1, 1]} : vector<4x2048xf32> to vector<4x128xf32>
    %29 = arith.addf %27, %28 : vector<4x128xf32>
    %30 = vector.extract_strided_slice %12 {offsets = [0, 896], sizes = [4, 128], strides = [1, 1]} : vector<4x2048xf32> to vector<4x128xf32>
    %31 = arith.addf %29, %30 : vector<4x128xf32>
    %32 = vector.extract_strided_slice %12 {offsets = [0, 1024], sizes = [4, 128], strides = [1, 1]} : vector<4x2048xf32> to vector<4x128xf32>
    %33 = arith.addf %31, %32 : vector<4x128xf32>
    %34 = vector.extract_strided_slice %12 {offsets = [0, 1152], sizes = [4, 128], strides = [1, 1]} : vector<4x2048xf32> to vector<4x128xf32>
    %35 = arith.addf %33, %34 : vector<4x128xf32>
    %36 = vector.extract_strided_slice %12 {offsets = [0, 1280], sizes = [4, 128], strides = [1, 1]} : vector<4x2048xf32> to vector<4x128xf32>
    %37 = arith.addf %35, %36 : vector<4x128xf32>
    %38 = vector.extract_strided_slice %12 {offsets = [0, 1408], sizes = [4, 128], strides = [1, 1]} : vector<4x2048xf32> to vector<4x128xf32>
    %39 = arith.addf %37, %38 : vector<4x128xf32>
    %40 = vector.extract_strided_slice %12 {offsets = [0, 1536], sizes = [4, 128], strides = [1, 1]} : vector<4x2048xf32> to vector<4x128xf32>
    %41 = arith.addf %39, %40 : vector<4x128xf32>
    %42 = vector.extract_strided_slice %12 {offsets = [0, 1664], sizes = [4, 128], strides = [1, 1]} : vector<4x2048xf32> to vector<4x128xf32>
    %43 = arith.addf %41, %42 : vector<4x128xf32>
    %44 = vector.extract_strided_slice %12 {offsets = [0, 1792], sizes = [4, 128], strides = [1, 1]} : vector<4x2048xf32> to vector<4x128xf32>
    %45 = arith.addf %43, %44 : vector<4x128xf32>
    %46 = vector.extract_strided_slice %12 {offsets = [0, 1920], sizes = [4, 128], strides = [1, 1]} : vector<4x2048xf32> to vector<4x128xf32>
    %47 = arith.addf %45, %46 : vector<4x128xf32>
    %48 = vector.shape_cast %16 : vector<4x2048xf32> to vector<4x1x2048xf32>
    %49 = vector.shape_cast %1 : vector<8x2048xf32> to vector<1x8x2048xf32>
    %50 = vector.broadcast %48 : vector<4x1x2048xf32> to vector<4x8x2048xf32>
    %51 = vector.broadcast %49 : vector<1x8x2048xf32> to vector<4x8x2048xf32>
    %52 = arith.mulf %50, %51 : vector<4x8x2048xf32>
    %53 = vector.shape_cast %52 : vector<4x8x2048xf32> to vector<32x2048xf32>
    %c0_6 = arith.constant 0 : index
    %c0_7 = arith.constant 0 : index
    %54 = vector.load %arg4[%c0_6, %c0_7] : memref<8x32xbf16, #tpu.memory_space<vmem>>, vector<8x32xbf16>
    %55 = arith.truncf %53 : vector<32x2048xf32> to vector<32x2048xbf16>
    %cst_8 = arith.constant dense<0.000000e+00> : vector<8x2048xf32>
    %56 = tpu.matmul %54, %55, %cst_8 {dimension_numbers = #tpu.dot_dimension_numbers<[1], [0], [0], [1], [0, 0, 1, 1], [], []>} : vector<8x32xbf16>, vector<32x2048xbf16>, vector<8x2048xf32> -> vector<8x2048xf32>
    %57 = vector.extract_strided_slice %56 {offsets = [0, 0], sizes = [8, 128], strides = [1, 1]} : vector<8x2048xf32> to vector<8x128xf32>
    %58 = vector.extract_strided_slice %56 {offsets = [0, 128], sizes = [8, 128], strides = [1, 1]} : vector<8x2048xf32> to vector<8x128xf32>
    %59 = arith.addf %57, %58 : vector<8x128xf32>
    %60 = vector.extract_strided_slice %56 {offsets = [0, 256], sizes = [8, 128], strides = [1, 1]} : vector<8x2048xf32> to vector<8x128xf32>
    %61 = arith.addf %59, %60 : vector<8x128xf32>
    %62 = vector.extract_strided_slice %56 {offsets = [0, 384], sizes = [8, 128], strides = [1, 1]} : vector<8x2048xf32> to vector<8x128xf32>
    %63 = arith.addf %61, %62 : vector<8x128xf32>
    %64 = vector.extract_strided_slice %56 {offsets = [0, 512], sizes = [8, 128], strides = [1, 1]} : vector<8x2048xf32> to vector<8x128xf32>
    %65 = arith.addf %63, %64 : vector<8x128xf32>
    %66 = vector.extract_strided_slice %56 {offsets = [0, 640], sizes = [8, 128], strides = [1, 1]} : vector<8x2048xf32> to vector<8x128xf32>
    %67 = arith.addf %65, %66 : vector<8x128xf32>
    %68 = vector.extract_strided_slice %56 {offsets = [0, 768], sizes = [8, 128], strides = [1, 1]} : vector<8x2048xf32> to vector<8x128xf32>
    %69 = arith.addf %67, %68 : vector<8x128xf32>
    %70 = vector.extract_strided_slice %56 {offsets = [0, 896], sizes = [8, 128], strides = [1, 1]} : vector<8x2048xf32> to vector<8x128xf32>
    %71 = arith.addf %69, %70 : vector<8x128xf32>
    %72 = vector.extract_strided_slice %56 {offsets = [0, 1024], sizes = [8, 128], strides = [1, 1]} : vector<8x2048xf32> to vector<8x128xf32>
    %73 = arith.addf %71, %72 : vector<8x128xf32>
    %74 = vector.extract_strided_slice %56 {offsets = [0, 1152], sizes = [8, 128], strides = [1, 1]} : vector<8x2048xf32> to vector<8x128xf32>
    %75 = arith.addf %73, %74 : vector<8x128xf32>
    %76 = vector.extract_strided_slice %56 {offsets = [0, 1280], sizes = [8, 128], strides = [1, 1]} : vector<8x2048xf32> to vector<8x128xf32>
    %77 = arith.addf %75, %76 : vector<8x128xf32>
    %78 = vector.extract_strided_slice %56 {offsets = [0, 1408], sizes = [8, 128], strides = [1, 1]} : vector<8x2048xf32> to vector<8x128xf32>
    %79 = arith.addf %77, %78 : vector<8x128xf32>
    %80 = vector.extract_strided_slice %56 {offsets = [0, 1536], sizes = [8, 128], strides = [1, 1]} : vector<8x2048xf32> to vector<8x128xf32>
    %81 = arith.addf %79, %80 : vector<8x128xf32>
    %82 = vector.extract_strided_slice %56 {offsets = [0, 1664], sizes = [8, 128], strides = [1, 1]} : vector<8x2048xf32> to vector<8x128xf32>
    %83 = arith.addf %81, %82 : vector<8x128xf32>
    %84 = vector.extract_strided_slice %56 {offsets = [0, 1792], sizes = [8, 128], strides = [1, 1]} : vector<8x2048xf32> to vector<8x128xf32>
    %85 = arith.addf %83, %84 : vector<8x128xf32>
    %86 = vector.extract_strided_slice %56 {offsets = [0, 1920], sizes = [8, 128], strides = [1, 1]} : vector<8x2048xf32> to vector<8x128xf32>
    %87 = arith.addf %85, %86 : vector<8x128xf32>
    %c0_9 = arith.constant 0 : index
    %c0_10 = arith.constant 0 : index
    %88 = vector.load %arg3[%c0_9, %c0_10] : memref<8x1xf32, #tpu.memory_space<vmem>>, vector<8x1xf32>
    %89 = vector.extract_strided_slice %88 {offsets = [4, 0], sizes = [4, 1], strides = [1, 1]} : vector<8x1xf32> to vector<4x1xf32>
    %cst_11 = arith.constant 1.600000e+01 : f32
    %90 = vector.broadcast %cst_11 : f32 to vector<4x1xf32>
    %91 = arith.mulf %90, %89 : vector<4x1xf32>
    %92 = vector.broadcast %91 : vector<4x1xf32> to vector<4x128xf32>
    %93 = arith.addf %47, %92 : vector<4x128xf32>
    %cst_12 = arith.constant 0.000000e+00 : f32
    %94 = vector.broadcast %cst_12 : f32 to vector<4x128xf32>
    %95 = tpu.concatenate %93, %94 in 0 : vector<4x128xf32>, vector<4x128xf32> -> vector<8x128xf32>
    %c0_13 = arith.constant 0 : index
    %c0_14 = arith.constant 0 : index
    %96 = vector.load %arg5[%c0_13, %c0_14] : memref<8x1xf32, #tpu.memory_space<vmem>>, vector<8x1xf32>
    %cst_15 = arith.constant 1.600000e+01 : f32
    %97 = vector.broadcast %cst_15 : f32 to vector<8x1xf32>
    %98 = arith.mulf %97, %96 : vector<8x1xf32>
    %99 = vector.broadcast %98 : vector<8x1xf32> to vector<8x128xf32>
    %100 = arith.addf %87, %99 : vector<8x128xf32>
    %101 = tpu.concatenate %95, %100 in 0 : vector<8x128xf32>, vector<8x128xf32> -> vector<16x128xf32>
    %c0_16 = arith.constant 0 : index
    %c0_17 = arith.constant 0 : index
    %102 = vector.load %arg6[%c0_16, %c0_17] : memref<16x128xf32, #tpu.memory_space<vmem>>, vector<16x128xf32>
    tpu.vector_store %arg6[%c0_16, %c0_17], %101 {strides = array<i32>} : memref<16x128xf32, #tpu.memory_space<vmem>>, vector<16x128xf32>,
    return
  }
  func.func @transform_0(%arg0: i32) -> (i32, i32, i32) {
    %c0_i32 = arith.constant 0 : i32
    %c0_i32_0 = arith.constant 0 : i32
    %c0_i32_1 = arith.constant 0 : i32
    return %arg0, %c0_i32, %c0_i32_0 : i32, i32, i32
  }
  func.func @transform_1(%arg0: i32) -> (i32, i32) {
    %c0_i32 = arith.constant 0 : i32
    %c0_i32_0 = arith.constant 0 : i32
    %c0_i32_1 = arith.constant 0 : i32
    return %c0_i32, %c0_i32_0 : i32, i32
  }
  func.func @transform_2(%arg0: i32) -> (i32, i32) {
    %c0_i32 = arith.constant 0 : i32
    %c0_i32_0 = arith.constant 0 : i32
    %c0_i32_1 = arith.constant 0 : i32
    return %c0_i32, %c0_i32_0 : i32, i32
  }
  func.func @transform_3(%arg0: i32) -> (i32, i32) {
    %c0_i32 = arith.constant 0 : i32
    %c0_i32_0 = arith.constant 0 : i32
    %c0_i32_1 = arith.constant 0 : i32
    return %c0_i32, %c0_i32_0 : i32, i32
  }
  func.func @transform_4(%arg0: i32) -> (i32, i32) {
    %c0_i32 = arith.constant 0 : i32
    %c0_i32_0 = arith.constant 0 : i32
    %c0_i32_1 = arith.constant 0 : i32
    return %c0_i32, %c0_i32_0 : i32, i32
  }
  func.func @transform_5(%arg0: i32) -> (i32, i32) {
    %c0_i32 = arith.constant 0 : i32
    %c0_i32_0 = arith.constant 0 : i32
    return %c0_i32, %arg0 : i32, i32
  }
}

</mosaic_0001>

<llo_original>
// kernel: tpu_custom_call.1
$region0: #{tpu_custom_call.1}
  #allocation0 [shape = 'u32[]', space=smem, size = 0x4, offset = 0x4, fixed_abs, tag = 'smem constant byte address 0x4 - core index']
  #allocation1 [shape = 'u32[144,128]{1,0:T(1,128)}', space=vmem, size = 0x12000, scoped, tag = 'internal scratch']
  %s0 = inlined_call_operand.hbm [shape: f32[2,8,2048], index: 0, kind: input, shape index: {}]
  %s1 = inlined_call_operand.vmem [shape: bf16[8,64], index: 1, kind: input, shape index: {}]
  %s2 = inlined_call_operand.vmem [shape: f32[8,1], index: 2, kind: input, shape index: {}]
  %s3 = inlined_call_operand.vmem [shape: bf16[8,32], index: 3, kind: input, shape index: {}]
  %s4 = inlined_call_operand.vmem [shape: f32[8,1], index: 4, kind: input, shape index: {}]
  %s5 = inlined_call_operand.hbm [shape: f32[16,256], index: 5, kind: output, shape index: {}]
  %s6 = sld [smem:[#allocation0]]
  $region57: #{tpu_custom_call.1} parent=0
    _
  %s8 = ssub.s32 1, %s6
  %s9 = scalar_select 0, %s8, %s6
  $region1: #{tpu_custom_call.1} parent=0
    #allocation2 [shape = 'u8[131072]{0}', space=vmem, size = 0x20000, scoped, tag = 'input window, operand 0']
    #allocation3 [shape = 's32[2]{0}', space=sflag, size = 0x8, scoped, tag = 'scoped memory for tpu_custom_call.1']
    #allocation4 [shape = 's32[2]{0}', space=sflag, size = 0x8, scoped, tag = 'scoped memory for tpu_custom_call.1']
    #allocation5 [shape = 'u8[16384]{0}', space=vmem, size = 0x4000, scoped, tag = 'output window, operand 0']
    %10 = vsyncpa [#allocation3], 0
    %s11 = scalar_lea.sflag [#allocation3], 1
    %12 = vsyncpa %s11, 0
    %13 = vsyncpa [#allocation4], 0
    %s14 = scalar_lea.sflag [#allocation4], 1
    %15 = vsyncpa %s14, 0
    loop: start=0, step=1, limit=4
    $region2: #{tpu_custom_call.1} parent=1 // loop_pre_header
      _
    $region3: #{tpu_custom_call.1} parent=1 // loop_header
      %s17 = sphi 0, %s21
      %p18 = scmp.ge.s32.totalorder %s17, 4
      %s27 = sphi 0, %s29
      %s30 = sphi 0, %s27
      %s31 = sphi 0, %s30
      %s47 = sphi 0, %s31
      %s51 = sphi 0, %s51
      %s53 = sphi 0, %s51
      %s54 = sphi 0, %s53
      %s68 = sphi 0, %s54
      %s72 = sphi 0, %s72
      %s74 = sphi 0, %s72
      %s75 = sphi 0, %s74
      %s89 = sphi 0, %s75
      %s93 = sphi 0, %s93
      %s95 = sphi 0, %s93
      %s96 = sphi 0, %s95
      %s110 = sphi 0, %s96
      %s114 = sphi 0, %s114
      %s116 = sphi 0, %s114
      %s117 = sphi 0, %s116
      %s131 = sphi 0, %s117
      %s137 = sphi 0, %s139
      %s140 = sphi 0, %s137
      %s141 = sphi 0, %s140
      %s157 = sphi 0, %s141
    $region4: #{tpu_custom_call.1} parent=1 // loop_header_branch
      %20 = sbr.rel (%p18) target = $region8
    $region5: #{tpu_custom_call.1} parent=1 // loop_body
      %s22 = ssub.s32 %s17, 1
      %s23 = ssub.s32 %s17, 2
      %s24 = sadd.s32 %s17, 1
      %s25 = ssub.s32 %s17, %s24
      %p26 = scmp.eq.s32.totalorder %s25, 0
      %s28 = sadd.s32 %s27, 1
      %s29 = scalar_select %p26, %s27, %s28
      %p32 = pneg %p26
      %p33 = scmp.eq.s32.totalorder %s17, 1
      %p34 = por %p32, %p33
      %p35 = scmp.ne.s32.totalorder %s27, %s30
      %p36 = scmp.eq.s32.totalorder %s17, 0
      %p37 = por %p35, %p36
      %p38 = scmp.ne.s32.totalorder %s27, %s30
      %p39 = scmp.eq.s32.totalorder %s22, 1
      %p40 = por %p38, %p39
      %p41 = scmp.ne.s32.totalorder %s30, %s31
      %p42 = scmp.eq.s32.totalorder %s22, 0
      %p43 = por %p41, %p42
      %p44 = scmp.ne.s32.totalorder %s30, %s31
      %p45 = scmp.eq.s32.totalorder %s23, 1
      %p46 = por %p44, %p45
      %p48 = scmp.ne.s32.totalorder %s31, %s47
      %p49 = scmp.eq.s32.totalorder %s23, 0
      %p50 = por %p48, %p49
      %s52 = sadd.s32 %s51, 1
      %p55 = scmp.eq.s32.totalorder %s17, 1
      %p56 = scmp.ne.s32.totalorder %s51, %s53
      %p57 = scmp.eq.s32.totalorder %s17, 0
      %p58 = por %p56, %p57
      %p59 = scmp.ne.s32.totalorder %s51, %s53
      %p60 = scmp.eq.s32.totalorder %s22, 1
      %p61 = por %p59, %p60
      %p62 = scmp.ne.s32.totalorder %s53, %s54
      %p63 = scmp.eq.s32.totalorder %s22, 0
      %p64 = por %p62, %p63
      %p65 = scmp.ne.s32.totalorder %s53, %s54
      %p66 = scmp.eq.s32.totalorder %s23, 1
      %p67 = por %p65, %p66
      %p69 = scmp.ne.s32.totalorder %s54, %s68
      %p70 = scmp.eq.s32.totalorder %s23, 0
      %p71 = por %p69, %p70
      %s73 = sadd.s32 %s72, 1
      %p76 = scmp.eq.s32.totalorder %s17, 1
      %p77 = scmp.ne.s32.totalorder %s72, %s74
      %p78 = scmp.eq.s32.totalorder %s17, 0
      %p79 = por %p77, %p78
      %p80 = scmp.ne.s32.totalorder %s72, %s74
      %p81 = scmp.eq.s32.totalorder %s22, 1
      %p82 = por %p80, %p81
      %p83 = scmp.ne.s32.totalorder %s74, %s75
      %p84 = scmp.eq.s32.totalorder %s22, 0
      %p85 = por %p83, %p84
      %p86 = scmp.ne.s32.totalorder %s74, %s75
      %p87 = scmp.eq.s32.totalorder %s23, 1
      %p88 = por %p86, %p87
      %p90 = scmp.ne.s32.totalorder %s75, %s89
      %p91 = scmp.eq.s32.totalorder %s23, 0
      %p92 = por %p90, %p91
      %s94 = sadd.s32 %s93, 1
      %p97 = scmp.eq.s32.totalorder %s17, 1
      %p98 = scmp.ne.s32.totalorder %s93, %s95
      %p99 = scmp.eq.s32.totalorder %s17, 0
      %p100 = por %p98, %p99
      %p101 = scmp.ne.s32.totalorder %s93, %s95
      %p102 = scmp.eq.s32.totalorder %s22, 1
      %p103 = por %p101, %p102
      %p104 = scmp.ne.s32.totalorder %s95, %s96
      %p105 = scmp.eq.s32.totalorder %s22, 0
      %p106 = por %p104, %p105
      %p107 = scmp.ne.s32.totalorder %s95, %s96
      %p108 = scmp.eq.s32.totalorder %s23, 1
      %p109 = por %p107, %p108
      %p111 = scmp.ne.s32.totalorder %s96, %s110
      %p112 = scmp.eq.s32.totalorder %s23, 0
      %p113 = por %p111, %p112
      %s115 = sadd.s32 %s114, 1
      %p118 = scmp.eq.s32.totalorder %s17, 1
      %p119 = scmp.ne.s32.totalorder %s114, %s116
      %p120 = scmp.eq.s32.totalorder %s17, 0
      %p121 = por %p119, %p120
      %p122 = scmp.ne.s32.totalorder %s114, %s116
      %p123 = scmp.eq.s32.totalorder %s22, 1
      %p124 = por %p122, %p123
      %p125 = scmp.ne.s32.totalorder %s116, %s117
      %p126 = scmp.eq.s32.totalorder %s22, 0
      %p127 = por %p125, %p126
      %p128 = scmp.ne.s32.totalorder %s116, %s117
      %p129 = scmp.eq.s32.totalorder %s23, 1
      %p130 = por %p128, %p129
      %p132 = scmp.ne.s32.totalorder %s117, %s131
      %p133 = scmp.eq.s32.totalorder %s23, 0
      %p134 = por %p132, %p133
      %s135 = ssub.s32 %s17, %s24
      %p136 = scmp.eq.s32.totalorder %s135, 0
      %s138 = sadd.s32 %s137, 1
      %s139 = scalar_select %p136, %s137, %s138
      %p142 = pneg %p136
      %p143 = scmp.eq.s32.totalorder %s17, 1
      %p144 = por %p142, %p143
      %p145 = scmp.ne.s32.totalorder %s137, %s140
      %p146 = scmp.eq.s32.totalorder %s17, 0
      %p147 = por %p145, %p146
      %p148 = scmp.ne.s32.totalorder %s137, %s140
      %p149 = scmp.eq.s32.totalorder %s22, 1
      %p150 = por %p148, %p149
      %p151 = scmp.ne.s32.totalorder %s140, %s141
      %p152 = scmp.eq.s32.totalorder %s22, 0
      %p153 = por %p151, %p152
      %p154 = scmp.ne.s32.totalorder %s140, %s141
      %p155 = scmp.eq.s32.totalorder %s23, 1
      %p156 = por %p154, %p155
      %p158 = scmp.ne.s32.totalorder %s141, %s157
      %p159 = scmp.eq.s32.totalorder %s23, 0
      %p160 = por %p158, %p159
      %p161 = scmp.le.s32.totalorder 1, %s17
      %p162 = scmp.lt.s32.totalorder %s17, 3
      %p163 = pnand %p161, %p162
      %p164 = pneg %p163
      // Predicated region
      $region9: #{tpu_custom_call.1} parent=5 // pred_check
        _
      $region10: #{tpu_custom_call.1} parent=5 // pred_check_branch
        %166 = sbr.rel (%p163) target = $region12
      $region11: #{tpu_custom_call.1} parent=5 // pred_region
        %s167 = ssub.s32 %s17, 1
        // Predicated region
        $region13: #{tpu_custom_call.1} parent=11 // pred_check
          %p168 = pneg %p64
        $region14: #{tpu_custom_call.1} parent=11 // pred_check_branch
          %170 = sbr.rel (%p168) target = $region16
        $region15: #{tpu_custom_call.1} parent=11 // pred_region
          _
        $region16: #{tpu_custom_call.1} parent=11 // pred_fallthru
          _
        // Predicated region
        $region17: #{tpu_custom_call.1} parent=11 // pred_check
          %p171 = pneg %p85
        $region18: #{tpu_custom_call.1} parent=11 // pred_check_branch
          %173 = sbr.rel (%p171) target = $region20
        $region19: #{tpu_custom_call.1} parent=11 // pred_region
          _
        $region20: #{tpu_custom_call.1} parent=11 // pred_fallthru
          _
        // Predicated region
        $region21: #{tpu_custom_call.1} parent=11 // pred_check
          %p174 = pneg %p106
        $region22: #{tpu_custom_call.1} parent=11 // pred_check_branch
          %176 = sbr.rel (%p174) target = $region24
        $region23: #{tpu_custom_call.1} parent=11 // pred_region
          _
        $region24: #{tpu_custom_call.1} parent=11 // pred_fallthru
          _
        // Predicated region
        $region25: #{tpu_custom_call.1} parent=11 // pred_check
          %p177 = pneg %p127
        $region26: #{tpu_custom_call.1} parent=11 // pred_check_branch
          %179 = sbr.rel (%p177) target = $region28
        $region27: #{tpu_custom_call.1} parent=11 // pred_region
          _
        $region28: #{tpu_custom_call.1} parent=11 // pred_fallthru
          _
      $region12: #{tpu_custom_call.1} parent=5 // pred_fallthru
        _
      %p180 = scmp.lt.s32.totalorder %s17, 2
      // Predicated region
      $region29: #{tpu_custom_call.1} parent=5 // pred_check
        %p181 = pneg %p180
      $region30: #{tpu_custom_call.1} parent=5 // pred_check_branch
        %183 = sbr.rel (%p181) target = $region32
      $region31: #{tpu_custom_call.1} parent=5 // pred_region
        // Predicated region
        $region33: #{tpu_custom_call.1} parent=31 // pred_check
          %p184 = pneg %p37
        $region34: #{tpu_custom_call.1} parent=31 // pred_check_branch
          %186 = sbr.rel (%p184) target = $region36
        $region35: #{tpu_custom_call.1} parent=31 // pred_region
          %s187 = sand.u32 %s27, 1
          %s188 = scalar_lea.sflag [#allocation3], %s187
          %s189 = sand.u32 %s27, 1
          %s190 = smul.addr %s189, 128
          %s191 = scalar_lea.vmem [#allocation2], %s190
          %s193 = ssub.s32 2048, 2048
          %194 = vsyncadd %s188, %s193
          %s195 = smul.addr %s17, 16
          %s196 = smul.addr %s195, 128
          %s197 = scalar_lea.hbm %s0, %s196
          %s199 = sshll.u32 %s191, 4
          %s200 = int_to_ptr.vmem [resolvable:$true] %s199
          %202 = dma.hbm_to_vmem [thread:$0]  %s197, 2048, %s200, %s188
        $region36: #{tpu_custom_call.1} parent=31 // pred_fallthru
          _
      $region32: #{tpu_custom_call.1} parent=5 // pred_fallthru
        _
      %p203 = scmp.le.s32.totalorder 1, %s17
      %p204 = scmp.lt.s32.totalorder %s17, 3
      %p205 = pnand %p203, %p204
      %p206 = pneg %p205
      // Predicated region
      $region37: #{tpu_custom_call.1} parent=5 // pred_check
        _
      $region38: #{tpu_custom_call.1} parent=5 // pred_check_branch
        %208 = sbr.rel (%p205) target = $region40
      $region39: #{tpu_custom_call.1} parent=5 // pred_region
        %s209 = ssub.s32 %s17, 1
        %s210 = sand.u32 %s30, 1
        %s211 = scalar_lea.sflag [#allocation3], %s210
        %s212 = sand.u32 %s30, 1
        %s213 = smul.addr %s212, 128
        %s214 = scalar_lea.vmem [#allocation2], %s213
        // Predicated region
        $region41: #{tpu_custom_call.1} parent=39 // pred_check
          %p215 = pneg %p43
        $region42: #{tpu_custom_call.1} parent=39 // pred_check_branch
          %217 = sbr.rel (%p215) target = $region44
        $region43: #{tpu_custom_call.1} parent=39 // pred_region
          %218 = dma.done %s211, 2048
        $region44: #{tpu_custom_call.1} parent=39 // pred_fallthru
          _
        %s219 = sand.u32 %s30, 1
        %s220 = scalar_lea.sflag [#allocation3], %s219
        %s221 = sand.u32 %s30, 1
        %s222 = smul.addr %s221, 128
        %s223 = scalar_lea.vmem [#allocation2], %s222
        %p224 = pneg %p43
        %p225 = pneg %p40
        %p226 = pneg %p64
        %p227 = pneg %p61
        %p228 = pneg %p85
        %p229 = pneg %p82
        %p230 = pneg %p106
        %p231 = pneg %p103
        %p232 = pneg %p127
        %p233 = pneg %p124
        %p234 = pneg %p153
        %p235 = pneg %p150
        %s236 = sand.u32 %s140, 1
        %s237 = scalar_lea.sflag [#allocation4], %s236
        %s238 = sand.u32 %s140, 1
        %s239 = smul.addr %s238, 16
        %s240 = scalar_lea.vmem [#allocation5], %s239
        %v242 = vld [vmem:[%s214] sm:$0xff]
        %v243 = vld [vmem:[%s214 + $0x8] sm:$0xff]
        %v244 = vld [vmem:[%s214 + $0x10] sm:$0xff]
        %v245 = vld [vmem:[%s214 + $0x18] sm:$0xff]
        %v246 = vld [vmem:[%s214 + $0x20] sm:$0xff]
        %v247 = vld [vmem:[%s214 + $0x28] sm:$0xff]
        %v248 = vld [vmem:[%s214 + $0x30] sm:$0xff]
        %v249 = vld [vmem:[%s214 + $0x38] sm:$0xff]
        %v250 = vld [vmem:[%s214 + $0x40] sm:$0xff]
        %v251 = vld [vmem:[%s214 + $0x48] sm:$0xff]
        %v252 = vld [vmem:[%s214 + $0x50] sm:$0xff]
        %v253 = vld [vmem:[%s214 + $0x58] sm:$0xff]
        %v254 = vld [vmem:[%s214 + $0x60] sm:$0xff]
        %v255 = vld [vmem:[%s214 + $0x68] sm:$0xff]
        %v256 = vld [vmem:[%s214 + $0x70] sm:$0xff]
        %v257 = vld [vmem:[%s214 + $0x78] sm:$0xff]
        %v274 = vcombine.low %v242, %v243
        %v275 = vcombine.high %v242, %v243
        %v276 = vcombine.low %v244, %v245
        %v277 = vcombine.high %v244, %v245
        %v278 = vcombine.low %v246, %v247
        %v279 = vcombine.high %v246, %v247
        %v280 = vcombine.low %v248, %v249
        %v281 = vcombine.high %v248, %v249
        %v283 = vunpack.c.l.s4 1966171168
        %v284 = vunpack.c.0.s8 %v283
        %v285 = vlaneseq
        %v286 = vshrl.u32 %v285, 7
        %v287 = vsub.s32 %v284, %v286
        %v288 = vrot.slane %v274, %v287
        %v290 = vunpack.c.l.s4 1966171168
        %v291 = vunpack.c.0.s8 %v290
        %v292 = vlaneseq
        %v293 = vshrl.u32 %v292, 7
        %v294 = vsub.s32 %v291, %v293
        %v295 = vrot.slane %v275, %v294
        %v297 = vunpack.c.l.s4 1966171168
        %v298 = vunpack.c.0.s8 %v297
        %v299 = vlaneseq
        %v300 = vshrl.u32 %v299, 7
        %v301 = vsub.s32 %v298, %v300
        %v302 = vrot.slane %v276, %v301
        %v304 = vunpack.c.l.s4 1966171168
        %v305 = vunpack.c.0.s8 %v304
        %v306 = vlaneseq
        %v307 = vshrl.u32 %v306, 7
        %v308 = vsub.s32 %v305, %v307
        %v309 = vrot.slane %v277, %v308
        %v311 = vunpack.c.l.s4 1966171168
        %v312 = vunpack.c.0.s8 %v311
        %v313 = vlaneseq
        %v314 = vshrl.u32 %v313, 7
        %v315 = vsub.s32 %v312, %v314
        %v316 = vrot.slane %v278, %v315
        %v318 = vunpack.c.l.s4 1966171168
        %v319 = vunpack.c.0.s8 %v318
        %v320 = vlaneseq
        %v321 = vshrl.u32 %v320, 7
        %v322 = vsub.s32 %v319, %v321
        %v323 = vrot.slane %v279, %v322
        %v325 = vunpack.c.l.s4 1966171168
        %v326 = vunpack.c.0.s8 %v325
        %v327 = vlaneseq
        %v328 = vshrl.u32 %v327, 7
        %v329 = vsub.s32 %v326, %v328
        %v330 = vrot.slane %v280, %v329
        %v332 = vunpack.c.l.s4 1966171168
        %v333 = vunpack.c.0.s8 %v332
        %v334 = vlaneseq
        %v335 = vshrl.u32 %v334, 7
        %v336 = vsub.s32 %v333, %v335
        %v337 = vrot.slane %v281, %v336
        %v338 = vcombine.low %v288, %v302
        %v339 = vcombine.high %v288, %v302
        %v340 = vcombine.low %v295, %v309
        %v341 = vcombine.high %v295, %v309
        %v342 = vcombine.low %v316, %v330
        %v343 = vcombine.high %v316, %v330
        %v344 = vcombine.low %v323, %v337
        %v345 = vcombine.high %v323, %v337
        %v347 = vunpack.c.l.s4 1966171168
        %v348 = vunpack.c.0.s8 %v347
        %v349 = vlaneseq
        %v350 = vshrl.u32 %v349, 7
        %v351 = vsub.s32 %v348, %v350
        %v352 = vrot.slane %v338, %v351
        %v354 = vunpack.c.l.s4 1966171168
        %v355 = vunpack.c.0.s8 %v354
        %v356 = vlaneseq
        %v357 = vshrl.u32 %v356, 7
        %v358 = vsub.s32 %v355, %v357
        %v359 = vrot.slane %v340, %v358
        %v361 = vunpack.c.l.s4 1966171168
        %v362 = vunpack.c.0.s8 %v361
        %v363 = vlaneseq
        %v364 = vshrl.u32 %v363, 7
        %v365 = vsub.s32 %v362, %v364
        %v366 = vrot.slane %v339, %v365
        %v368 = vunpack.c.l.s4 1966171168
        %v369 = vunpack.c.0.s8 %v368
        %v370 = vlaneseq
        %v371 = vshrl.u32 %v370, 7
        %v372 = vsub.s32 %v369, %v371
        %v373 = vrot.slane %v341, %v372
        %v375 = vunpack.c.l.s4 1966171168
        %v376 = vunpack.c.0.s8 %v375
        %v377 = vlaneseq
        %v378 = vshrl.u32 %v377, 7
        %v379 = vsub.s32 %v376, %v378
        %v380 = vrot.slane %v342, %v379
        %v382 = vunpack.c.l.s4 1966171168
        %v383 = vunpack.c.0.s8 %v382
        %v384 = vlaneseq
        %v385 = vshrl.u32 %v384, 7
        %v386 = vsub.s32 %v383, %v385
        %v387 = vrot.slane %v344, %v386
        %v389 = vunpack.c.l.s4 1966171168
        %v390 = vunpack.c.0.s8 %v389
        %v391 = vlaneseq
        %v392 = vshrl.u32 %v391, 7
        %v393 = vsub.s32 %v390, %v392
        %v394 = vrot.slane %v343, %v393
        %v396 = vunpack.c.l.s4 1966171168
        %v397 = vunpack.c.0.s8 %v396
        %v398 = vlaneseq
        %v399 = vshrl.u32 %v398, 7
        %v400 = vsub.s32 %v397, %v399
        %v401 = vrot.slane %v345, %v400
        %v402 = vcombine.low %v352, %v380
        %v403 = vcombine.high %v352, %v380
        %v404 = vcombine.low %v359, %v387
        %v405 = vcombine.high %v359, %v387
        %v406 = vcombine.low %v366, %v394
        %v407 = vcombine.high %v366, %v394
        %v408 = vcombine.low %v373, %v401
        %v409 = vcombine.high %v373, %v401
        %v410 = vcombine.low %v250, %v251
        %v411 = vcombine.high %v250, %v251
        %v412 = vcombine.low %v252, %v253
        %v413 = vcombine.high %v252, %v253
        %v414 = vcombine.low %v254, %v255
        %v415 = vcombine.high %v254, %v255
        %v416 = vcombine.low %v256, %v257
        %v417 = vcombine.high %v256, %v257
        %v419 = vunpack.c.l.s4 1966171168
        %v420 = vunpack.c.0.s8 %v419
        %v421 = vlaneseq
        %v422 = vshrl.u32 %v421, 7
        %v423 = vsub.s32 %v420, %v422
        %v424 = vrot.slane %v410, %v423
        %v426 = vunpack.c.l.s4 1966171168
        %v427 = vunpack.c.0.s8 %v426
        %v428 = vlaneseq
        %v429 = vshrl.u32 %v428, 7
        %v430 = vsub.s32 %v427, %v429
        %v431 = vrot.slane %v411, %v430
        %v433 = vunpack.c.l.s4 1966171168
        %v434 = vunpack.c.0.s8 %v433
        %v435 = vlaneseq
        %v436 = vshrl.u32 %v435, 7
        %v437 = vsub.s32 %v434, %v436
        %v438 = vrot.slane %v412, %v437
        %v440 = vunpack.c.l.s4 1966171168
        %v441 = vunpack.c.0.s8 %v440
        %v442 = vlaneseq
        %v443 = vshrl.u32 %v442, 7
        %v444 = vsub.s32 %v441, %v443
        %v445 = vrot.slane %v413, %v444
        %v447 = vunpack.c.l.s4 1966171168
        %v448 = vunpack.c.0.s8 %v447
        %v449 = vlaneseq
        %v450 = vshrl.u32 %v449, 7
        %v451 = vsub.s32 %v448, %v450
        %v452 = vrot.slane %v414, %v451
        %v454 = vunpack.c.l.s4 1966171168
        %v455 = vunpack.c.0.s8 %v454
        %v456 = vlaneseq
        %v457 = vshrl.u32 %v456, 7
        %v458 = vsub.s32 %v455, %v457
        %v459 = vrot.slane %v415, %v458
        %v461 = vunpack.c.l.s4 1966171168
        %v462 = vunpack.c.0.s8 %v461
        %v463 = vlaneseq
        %v464 = vshrl.u32 %v463, 7
        %v465 = vsub.s32 %v462, %v464
        %v466 = vrot.slane %v416, %v465
        %v468 = vunpack.c.l.s4 1966171168
        %v469 = vunpack.c.0.s8 %v468
        %v470 = vlaneseq
        %v471 = vshrl.u32 %v470, 7
        %v472 = vsub.s32 %v469, %v471
        %v473 = vrot.slane %v417, %v472
        %v474 = vcombine.low %v424, %v438
        %v475 = vcombine.high %v424, %v438
        %v476 = vcombine.low %v431, %v445
        %v477 = vcombine.high %v431, %v445
        %v478 = vcombine.low %v452, %v466
        %v479 = vcombine.high %v452, %v466
        %v480 = vcombine.low %v459, %v473
        %v481 = vcombine.high %v459, %v473
        %v483 = vunpack.c.l.s4 1966171168
        %v484 = vunpack.c.0.s8 %v483
        %v485 = vlaneseq
        %v486 = vshrl.u32 %v485, 7
        %v487 = vsub.s32 %v484, %v486
        %v488 = vrot.slane %v474, %v487
        %v490 = vunpack.c.l.s4 1966171168
        %v491 = vunpack.c.0.s8 %v490
        %v492 = vlaneseq
        %v493 = vshrl.u32 %v492, 7
        %v494 = vsub.s32 %v491, %v493
        %v495 = vrot.slane %v476, %v494
        %v497 = vunpack.c.l.s4 1966171168
        %v498 = vunpack.c.0.s8 %v497
        %v499 = vlaneseq
        %v500 = vshrl.u32 %v499, 7
        %v501 = vsub.s32 %v498, %v500
        %v502 = vrot.slane %v475, %v501
        %v504 = vunpack.c.l.s4 1966171168
        %v505 = vunpack.c.0.s8 %v504
        %v506 = vlaneseq
        %v507 = vshrl.u32 %v506, 7
        %v508 = vsub.s32 %v505, %v507
        %v509 = vrot.slane %v477, %v508
        %v511 = vunpack.c.l.s4 1966171168
        %v512 = vunpack.c.0.s8 %v511
        %v513 = vlaneseq
        %v514 = vshrl.u32 %v513, 7
        %v515 = vsub.s32 %v512, %v514
        %v516 = vrot.slane %v478, %v515
        %v518 = vunpack.c.l.s4 1966171168
        %v519 = vunpack.c.0.s8 %v518
        %v520 = vlaneseq
        %v521 = vshrl.u32 %v520, 7
        %v522 = vsub.s32 %v519, %v521
        %v523 = vrot.slane %v480, %v522
        %v525 = vunpack.c.l.s4 1966171168
        %v526 = vunpack.c.0.s8 %v525
        %v527 = vlaneseq
        %v528 = vshrl.u32 %v527, 7
        %v529 = vsub.s32 %v526, %v528
        %v530 = vrot.slane %v479, %v529
        %v532 = vunpack.c.l.s4 1966171168
        %v533 = vunpack.c.0.s8 %v532
        %v534 = vlaneseq
        %v535 = vshrl.u32 %v534, 7
        %v536 = vsub.s32 %v533, %v535
        %v537 = vrot.slane %v481, %v536
        %v538 = vcombine.low %v488, %v516
        %v539 = vcombine.high %v488, %v516
        %v540 = vcombine.low %v495, %v523
        %v541 = vcombine.high %v495, %v523
        %v542 = vcombine.low %v502, %v530
        %v543 = vcombine.high %v502, %v530
        %v544 = vcombine.low %v509, %v537
        %v545 = vcombine.high %v509, %v537
        %v546 = vlaneseq
        %v547 = vshrl.u32 %v546, 7
        %v548 = vsub.s32 0, %v547
        %v549 = vrot.slane %v402, %v548
        %v550 = vlaneseq
        %v551 = vshrl.u32 %v550, 7
        %v552 = vsub.s32 1, %v551
        %v553 = vrot.slane %v402, %v552
        %v554 = vlaneseq
        %v555 = vshrl.u32 %v554, 7
        %v556 = vsub.s32 2, %v555
        %v557 = vrot.slane %v402, %v556
        %v558 = vlaneseq
        %v559 = vshrl.u32 %v558, 7
        %v560 = vsub.s32 3, %v559
        %v561 = vrot.slane %v402, %v560
        %v562 = vlaneseq
        %v563 = vshrl.u32 %v562, 7
        %v564 = vsub.s32 4, %v563
        %v565 = vrot.slane %v402, %v564
        %v566 = vlaneseq
        %v567 = vshrl.u32 %v566, 7
        %v568 = vsub.s32 5, %v567
        %v569 = vrot.slane %v402, %v568
        %v570 = vlaneseq
        %v571 = vshrl.u32 %v570, 7
        %v572 = vsub.s32 6, %v571
        %v573 = vrot.slane %v402, %v572
        %v574 = vlaneseq
        %v575 = vshrl.u32 %v574, 7
        %v576 = vsub.s32 7, %v575
        %v577 = vrot.slane %v402, %v576
        %v578 = vlaneseq
        %v579 = vshrl.u32 %v578, 7
        %v580 = vsub.s32 0, %v579
        %v581 = vrot.slane %v538, %v580
        %v582 = vlaneseq
        %v583 = vshrl.u32 %v582, 7
        %v584 = vsub.s32 1, %v583
        %v585 = vrot.slane %v538, %v584
        %v586 = vlaneseq
        %v587 = vshrl.u32 %v586, 7
        %v588 = vsub.s32 2, %v587
        %v589 = vrot.slane %v538, %v588
        %v590 = vlaneseq
        %v591 = vshrl.u32 %v590, 7
        %v592 = vsub.s32 3, %v591
        %v593 = vrot.slane %v538, %v592
        %v594 = vlaneseq
        %v595 = vshrl.u32 %v594, 7
        %v596 = vsub.s32 4, %v595
        %v597 = vrot.slane %v538, %v596
        %v598 = vlaneseq
        %v599 = vshrl.u32 %v598, 7
        %v600 = vsub.s32 5, %v599
        %v601 = vrot.slane %v538, %v600
        %v602 = vlaneseq
        %v603 = vshrl.u32 %v602, 7
        %v604 = vsub.s32 6, %v603
        %v605 = vrot.slane %v538, %v604
        %v606 = vlaneseq
        %v607 = vshrl.u32 %v606, 7
        %v608 = vsub.s32 7, %v607
        %v609 = vrot.slane %v538, %v608
        %v610 = vlaneseq
        %v611 = vshrl.u32 %v610, 7
        %v612 = vsub.s32 0, %v611
        %v613 = vrot.slane %v406, %v612
        %v614 = vlaneseq
        %v615 = vshrl.u32 %v614, 7
        %v616 = vsub.s32 1, %v615
        %v617 = vrot.slane %v406, %v616
        %v618 = vlaneseq
        %v619 = vshrl.u32 %v618, 7
        %v620 = vsub.s32 2, %v619
        %v621 = vrot.slane %v406, %v620
        %v622 = vlaneseq
        %v623 = vshrl.u32 %v622, 7
        %v624 = vsub.s32 3, %v623
        %v625 = vrot.slane %v406, %v624
        %v626 = vlaneseq
        %v627 = vshrl.u32 %v626, 7
        %v628 = vsub.s32 4, %v627
        %v629 = vrot.slane %v406, %v628
        %v630 = vlaneseq
        %v631 = vshrl.u32 %v630, 7
        %v632 = vsub.s32 5, %v631
        %v633 = vrot.slane %v406, %v632
        %v634 = vlaneseq
        %v635 = vshrl.u32 %v634, 7
        %v636 = vsub.s32 6, %v635
        %v637 = vrot.slane %v406, %v636
        %v638 = vlaneseq
        %v639 = vshrl.u32 %v638, 7
        %v640 = vsub.s32 7, %v639
        %v641 = vrot.slane %v406, %v640
        %v642 = vlaneseq
        %v643 = vshrl.u32 %v642, 7
        %v644 = vsub.s32 0, %v643
        %v645 = vrot.slane %v542, %v644
        %v646 = vlaneseq
        %v647 = vshrl.u32 %v646, 7
        %v648 = vsub.s32 1, %v647
        %v649 = vrot.slane %v542, %v648
        %v650 = vlaneseq
        %v651 = vshrl.u32 %v650, 7
        %v652 = vsub.s32 2, %v651
        %v653 = vrot.slane %v542, %v652
        %v654 = vlaneseq
        %v655 = vshrl.u32 %v654, 7
        %v656 = vsub.s32 3, %v655
        %v657 = vrot.slane %v542, %v656
        %v658 = vlaneseq
        %v659 = vshrl.u32 %v658, 7
        %v660 = vsub.s32 4, %v659
        %v661 = vrot.slane %v542, %v660
        %v662 = vlaneseq
        %v663 = vshrl.u32 %v662, 7
        %v664 = vsub.s32 5, %v663
        %v665 = vrot.slane %v542, %v664
        %v666 = vlaneseq
        %v667 = vshrl.u32 %v666, 7
        %v668 = vsub.s32 6, %v667
        %v669 = vrot.slane %v542, %v668
        %v670 = vlaneseq
        %v671 = vshrl.u32 %v670, 7
        %v672 = vsub.s32 7, %v671
        %v673 = vrot.slane %v542, %v672
        %v674 = vlaneseq
        %v675 = vshrl.u32 %v674, 7
        %v676 = vsub.s32 0, %v675
        %v677 = vrot.slane %v403, %v676
        %v678 = vlaneseq
        %v679 = vshrl.u32 %v678, 7
        %v680 = vsub.s32 1, %v679
        %v681 = vrot.slane %v403, %v680
        %v682 = vlaneseq
        %v683 = vshrl.u32 %v682, 7
        %v684 = vsub.s32 2, %v683
        %v685 = vrot.slane %v403, %v684
        %v686 = vlaneseq
        %v687 = vshrl.u32 %v686, 7
        %v688 = vsub.s32 3, %v687
        %v689 = vrot.slane %v403, %v688
        %v690 = vlaneseq
        %v691 = vshrl.u32 %v690, 7
        %v692 = vsub.s32 4, %v691
        %v693 = vrot.slane %v403, %v692
        %v694 = vlaneseq
        %v695 = vshrl.u32 %v694, 7
        %v696 = vsub.s32 5, %v695
        %v697 = vrot.slane %v403, %v696
        %v698 = vlaneseq
        %v699 = vshrl.u32 %v698, 7
        %v700 = vsub.s32 6, %v699
        %v701 = vrot.slane %v403, %v700
        %v702 = vlaneseq
        %v703 = vshrl.u32 %v702, 7
        %v704 = vsub.s32 7, %v703
        %v705 = vrot.slane %v403, %v704
        %v706 = vlaneseq
        %v707 = vshrl.u32 %v706, 7
        %v708 = vsub.s32 0, %v707
        %v709 = vrot.slane %v539, %v708
        %v710 = vlaneseq
        %v711 = vshrl.u32 %v710, 7
        %v712 = vsub.s32 1, %v711
        %v713 = vrot.slane %v539, %v712
        %v714 = vlaneseq
        %v715 = vshrl.u32 %v714, 7
        %v716 = vsub.s32 2, %v715
        %v717 = vrot.slane %v539, %v716
        %v718 = vlaneseq
        %v719 = vshrl.u32 %v718, 7
        %v720 = vsub.s32 3, %v719
        %v721 = vrot.slane %v539, %v720
        %v722 = vlaneseq
        %v723 = vshrl.u32 %v722, 7
        %v724 = vsub.s32 4, %v723
        %v725 = vrot.slane %v539, %v724
        %v726 = vlaneseq
        %v727 = vshrl.u32 %v726, 7
        %v728 = vsub.s32 5, %v727
        %v729 = vrot.slane %v539, %v728
        %v730 = vlaneseq
        %v731 = vshrl.u32 %v730, 7
        %v732 = vsub.s32 6, %v731
        %v733 = vrot.slane %v539, %v732
        %v734 = vlaneseq
        %v735 = vshrl.u32 %v734, 7
        %v736 = vsub.s32 7, %v735
        %v737 = vrot.slane %v539, %v736
        %v738 = vlaneseq
        %v739 = vshrl.u32 %v738, 7
        %v740 = vsub.s32 0, %v739
        %v741 = vrot.slane %v407, %v740
        %v742 = vlaneseq
        %v743 = vshrl.u32 %v742, 7
        %v744 = vsub.s32 1, %v743
        %v745 = vrot.slane %v407, %v744
        %v746 = vlaneseq
        %v747 = vshrl.u32 %v746, 7
        %v748 = vsub.s32 2, %v747
        %v749 = vrot.slane %v407, %v748
        %v750 = vlaneseq
        %v751 = vshrl.u32 %v750, 7
        %v752 = vsub.s32 3, %v751
        %v753 = vrot.slane %v407, %v752
        %v754 = vlaneseq
        %v755 = vshrl.u32 %v754, 7
        %v756 = vsub.s32 4, %v755
        %v757 = vrot.slane %v407, %v756
        %v758 = vlaneseq
        %v759 = vshrl.u32 %v758, 7
        %v760 = vsub.s32 5, %v759
        %v761 = vrot.slane %v407, %v760
        %v762 = vlaneseq
        %v763 = vshrl.u32 %v762, 7
        %v764 = vsub.s32 6, %v763
        %v765 = vrot.slane %v407, %v764
        %v766 = vlaneseq
        %v767 = vshrl.u32 %v766, 7
        %v768 = vsub.s32 7, %v767
        %v769 = vrot.slane %v407, %v768
        %v770 = vlaneseq
        %v771 = vshrl.u32 %v770, 7
        %v772 = vsub.s32 0, %v771
        %v773 = vrot.slane %v543, %v772
        %v774 = vlaneseq
        %v775 = vshrl.u32 %v774, 7
        %v776 = vsub.s32 1, %v775
        %v777 = vrot.slane %v543, %v776
        %v778 = vlaneseq
        %v779 = vshrl.u32 %v778, 7
        %v780 = vsub.s32 2, %v779
        %v781 = vrot.slane %v543, %v780
        %v782 = vlaneseq
        %v783 = vshrl.u32 %v782, 7
        %v784 = vsub.s32 3, %v783
        %v785 = vrot.slane %v543, %v784
        %v786 = vlaneseq
        %v787 = vshrl.u32 %v786, 7
        %v788 = vsub.s32 4, %v787
        %v789 = vrot.slane %v543, %v788
        %v790 = vlaneseq
        %v791 = vshrl.u32 %v790, 7
        %v792 = vsub.s32 5, %v791
        %v793 = vrot.slane %v543, %v792
        %v794 = vlaneseq
        %v795 = vshrl.u32 %v794, 7
        %v796 = vsub.s32 6, %v795
        %v797 = vrot.slane %v543, %v796
        %v798 = vlaneseq
        %v799 = vshrl.u32 %v798, 7
        %v800 = vsub.s32 7, %v799
        %v801 = vrot.slane %v543, %v800
        %v802 = vlaneseq
        %v803 = vshrl.u32 %v802, 7
        %v804 = vsub.s32 0, %v803
        %v805 = vrot.slane %v404, %v804
        %v806 = vlaneseq
        %v807 = vshrl.u32 %v806, 7
        %v808 = vsub.s32 1, %v807
        %v809 = vrot.slane %v404, %v808
        %v810 = vlaneseq
        %v811 = vshrl.u32 %v810, 7
        %v812 = vsub.s32 2, %v811
        %v813 = vrot.slane %v404, %v812
        %v814 = vlaneseq
        %v815 = vshrl.u32 %v814, 7
        %v816 = vsub.s32 3, %v815
        %v817 = vrot.slane %v404, %v816
        %v818 = vlaneseq
        %v819 = vshrl.u32 %v818, 7
        %v820 = vsub.s32 4, %v819
        %v821 = vrot.slane %v404, %v820
        %v822 = vlaneseq
        %v823 = vshrl.u32 %v822, 7
        %v824 = vsub.s32 5, %v823
        %v825 = vrot.slane %v404, %v824
        %v826 = vlaneseq
        %v827 = vshrl.u32 %v826, 7
        %v828 = vsub.s32 6, %v827
        %v829 = vrot.slane %v404, %v828
        %v830 = vlaneseq
        %v831 = vshrl.u32 %v830, 7
        %v832 = vsub.s32 7, %v831
        %v833 = vrot.slane %v404, %v832
        %v834 = vlaneseq
        %v835 = vshrl.u32 %v834, 7
        %v836 = vsub.s32 0, %v835
        %v837 = vrot.slane %v540, %v836
        %v838 = vlaneseq
        %v839 = vshrl.u32 %v838, 7
        %v840 = vsub.s32 1, %v839
        %v841 = vrot.slane %v540, %v840
        %v842 = vlaneseq
        %v843 = vshrl.u32 %v842, 7
        %v844 = vsub.s32 2, %v843
        %v845 = vrot.slane %v540, %v844
        %v846 = vlaneseq
        %v847 = vshrl.u32 %v846, 7
        %v848 = vsub.s32 3, %v847
        %v849 = vrot.slane %v540, %v848
        %v850 = vlaneseq
        %v851 = vshrl.u32 %v850, 7
        %v852 = vsub.s32 4, %v851
        %v853 = vrot.slane %v540, %v852
        %v854 = vlaneseq
        %v855 = vshrl.u32 %v854, 7
        %v856 = vsub.s32 5, %v855
        %v857 = vrot.slane %v540, %v856
        %v858 = vlaneseq
        %v859 = vshrl.u32 %v858, 7
        %v860 = vsub.s32 6, %v859
        %v861 = vrot.slane %v540, %v860
        %v862 = vlaneseq
        %v863 = vshrl.u32 %v862, 7
        %v864 = vsub.s32 7, %v863
        %v865 = vrot.slane %v540, %v864
        %v866 = vlaneseq
        %v867 = vshrl.u32 %v866, 7
        %v868 = vsub.s32 0, %v867
        %v869 = vrot.slane %v408, %v868
        %v870 = vlaneseq
        %v871 = vshrl.u32 %v870, 7
        %v872 = vsub.s32 1, %v871
        %v873 = vrot.slane %v408, %v872
        %v874 = vlaneseq
        %v875 = vshrl.u32 %v874, 7
        %v876 = vsub.s32 2, %v875
        %v877 = vrot.slane %v408, %v876
        %v878 = vlaneseq
        %v879 = vshrl.u32 %v878, 7
        %v880 = vsub.s32 3, %v879
        %v881 = vrot.slane %v408, %v880
        %v882 = vlaneseq
        %v883 = vshrl.u32 %v882, 7
        %v884 = vsub.s32 4, %v883
        %v885 = vrot.slane %v408, %v884
        %v886 = vlaneseq
        %v887 = vshrl.u32 %v886, 7
        %v888 = vsub.s32 5, %v887
        %v889 = vrot.slane %v408, %v888
        %v890 = vlaneseq
        %v891 = vshrl.u32 %v890, 7
        %v892 = vsub.s32 6, %v891
        %v893 = vrot.slane %v408, %v892
        %v894 = vlaneseq
        %v895 = vshrl.u32 %v894, 7
        %v896 = vsub.s32 7, %v895
        %v897 = vrot.slane %v408, %v896
        %v898 = vlaneseq
        %v899 = vshrl.u32 %v898, 7
        %v900 = vsub.s32 0, %v899
        %v901 = vrot.slane %v544, %v900
        %v902 = vlaneseq
        %v903 = vshrl.u32 %v902, 7
        %v904 = vsub.s32 1, %v903
        %v905 = vrot.slane %v544, %v904
        %v906 = vlaneseq
        %v907 = vshrl.u32 %v906, 7
        %v908 = vsub.s32 2, %v907
        %v909 = vrot.slane %v544, %v908
        %v910 = vlaneseq
        %v911 = vshrl.u32 %v910, 7
        %v912 = vsub.s32 3, %v911
        %v913 = vrot.slane %v544, %v912
        %v914 = vlaneseq
        %v915 = vshrl.u32 %v914, 7
        %v916 = vsub.s32 4, %v915
        %v917 = vrot.slane %v544, %v916
        %v918 = vlaneseq
        %v919 = vshrl.u32 %v918, 7
        %v920 = vsub.s32 5, %v919
        %v921 = vrot.slane %v544, %v920
        %v922 = vlaneseq
        %v923 = vshrl.u32 %v922, 7
        %v924 = vsub.s32 6, %v923
        %v925 = vrot.slane %v544, %v924
        %v926 = vlaneseq
        %v927 = vshrl.u32 %v926, 7
        %v928 = vsub.s32 7, %v927
        %v929 = vrot.slane %v544, %v928
        %v930 = vlaneseq
        %v931 = vshrl.u32 %v930, 7
        %v932 = vsub.s32 0, %v931
        %v933 = vrot.slane %v405, %v932
        %v934 = vlaneseq
        %v935 = vshrl.u32 %v934, 7
        %v936 = vsub.s32 1, %v935
        %v937 = vrot.slane %v405, %v936
        %v938 = vlaneseq
        %v939 = vshrl.u32 %v938, 7
        %v940 = vsub.s32 2, %v939
        %v941 = vrot.slane %v405, %v940
        %v942 = vlaneseq
        %v943 = vshrl.u32 %v942, 7
        %v944 = vsub.s32 3, %v943
        %v945 = vrot.slane %v405, %v944
        %v946 = vlaneseq
        %v947 = vshrl.u32 %v946, 7
        %v948 = vsub.s32 4, %v947
        %v949 = vrot.slane %v405, %v948
        %v950 = vlaneseq
        %v951 = vshrl.u32 %v950, 7
        %v952 = vsub.s32 5, %v951
        %v953 = vrot.slane %v405, %v952
        %v954 = vlaneseq
        %v955 = vshrl.u32 %v954, 7
        %v956 = vsub.s32 6, %v955
        %v957 = vrot.slane %v405, %v956
        %v958 = vlaneseq
        %v959 = vshrl.u32 %v958, 7
        %v960 = vsub.s32 7, %v959
        %v961 = vrot.slane %v405, %v960
        %v962 = vlaneseq
        %v963 = vshrl.u32 %v962, 7
        %v964 = vsub.s32 0, %v963
        %v965 = vrot.slane %v541, %v964
        %v966 = vlaneseq
        %v967 = vshrl.u32 %v966, 7
        %v968 = vsub.s32 1, %v967
        %v969 = vrot.slane %v541, %v968
        %v970 = vlaneseq
        %v971 = vshrl.u32 %v970, 7
        %v972 = vsub.s32 2, %v971
        %v973 = vrot.slane %v541, %v972
        %v974 = vlaneseq
        %v975 = vshrl.u32 %v974, 7
        %v976 = vsub.s32 3, %v975
        %v977 = vrot.slane %v541, %v976
        %v978 = vlaneseq
        %v979 = vshrl.u32 %v978, 7
        %v980 = vsub.s32 4, %v979
        %v981 = vrot.slane %v541, %v980
        %v982 = vlaneseq
        %v983 = vshrl.u32 %v982, 7
        %v984 = vsub.s32 5, %v983
        %v985 = vrot.slane %v541, %v984
        %v986 = vlaneseq
        %v987 = vshrl.u32 %v986, 7
        %v988 = vsub.s32 6, %v987
        %v989 = vrot.slane %v541, %v988
        %v990 = vlaneseq
        %v991 = vshrl.u32 %v990, 7
        %v992 = vsub.s32 7, %v991
        %v993 = vrot.slane %v541, %v992
        %v994 = vlaneseq
        %v995 = vshrl.u32 %v994, 7
        %v996 = vsub.s32 0, %v995
        %v997 = vrot.slane %v409, %v996
        %v998 = vlaneseq
        %v999 = vshrl.u32 %v998, 7
        %v1000 = vsub.s32 1, %v999
        %v1001 = vrot.slane %v409, %v1000
        %v1002 = vlaneseq
        %v1003 = vshrl.u32 %v1002, 7
        %v1004 = vsub.s32 2, %v1003
        %v1005 = vrot.slane %v409, %v1004
        %v1006 = vlaneseq
        %v1007 = vshrl.u32 %v1006, 7
        %v1008 = vsub.s32 3, %v1007
        %v1009 = vrot.slane %v409, %v1008
        %v1010 = vlaneseq
        %v1011 = vshrl.u32 %v1010, 7
        %v1012 = vsub.s32 4, %v1011
        %v1013 = vrot.slane %v409, %v1012
        %v1014 = vlaneseq
        %v1015 = vshrl.u32 %v1014, 7
        %v1016 = vsub.s32 5, %v1015
        %v1017 = vrot.slane %v409, %v1016
        %v1018 = vlaneseq
        %v1019 = vshrl.u32 %v1018, 7
        %v1020 = vsub.s32 6, %v1019
        %v1021 = vrot.slane %v409, %v1020
        %v1022 = vlaneseq
        %v1023 = vshrl.u32 %v1022, 7
        %v1024 = vsub.s32 7, %v1023
        %v1025 = vrot.slane %v409, %v1024
        %v1026 = vlaneseq
        %v1027 = vshrl.u32 %v1026, 7
        %v1028 = vsub.s32 0, %v1027
        %v1029 = vrot.slane %v545, %v1028
        %v1030 = vlaneseq
        %v1031 = vshrl.u32 %v1030, 7
        %v1032 = vsub.s32 1, %v1031
        %v1033 = vrot.slane %v545, %v1032
        %v1034 = vlaneseq
        %v1035 = vshrl.u32 %v1034, 7
        %v1036 = vsub.s32 2, %v1035
        %v1037 = vrot.slane %v545, %v1036
        %v1038 = vlaneseq
        %v1039 = vshrl.u32 %v1038, 7
        %v1040 = vsub.s32 3, %v1039
        %v1041 = vrot.slane %v545, %v1040
        %v1042 = vlaneseq
        %v1043 = vshrl.u32 %v1042, 7
        %v1044 = vsub.s32 4, %v1043
        %v1045 = vrot.slane %v545, %v1044
        %v1046 = vlaneseq
        %v1047 = vshrl.u32 %v1046, 7
        %v1048 = vsub.s32 5, %v1047
        %v1049 = vrot.slane %v545, %v1048
        %v1050 = vlaneseq
        %v1051 = vshrl.u32 %v1050, 7
        %v1052 = vsub.s32 6, %v1051
        %v1053 = vrot.slane %v545, %v1052
        %v1054 = vlaneseq
        %v1055 = vshrl.u32 %v1054, 7
        %v1056 = vsub.s32 7, %v1055
        %v1057 = vrot.slane %v545, %v1056
        %v1186 = vmul.f32 %v549, %v242
        %v1187 = vmul.f32 %v553, %v243
        %v1188 = vmul.f32 %v557, %v244
        %v1189 = vmul.f32 %v561, %v245
        %v1190 = vmul.f32 %v565, %v246
        %v1191 = vmul.f32 %v569, %v247
        %v1192 = vmul.f32 %v573, %v248
        %v1193 = vmul.f32 %v577, %v249
        %v1194 = vmul.f32 %v581, %v250
        %v1195 = vmul.f32 %v585, %v251
        %v1196 = vmul.f32 %v589, %v252
        %v1197 = vmul.f32 %v593, %v253
        %v1198 = vmul.f32 %v597, %v254
        %v1199 = vmul.f32 %v601, %v255
        %v1200 = vmul.f32 %v605, %v256
        %v1201 = vmul.f32 %v609, %v257
        %v1202 = vmul.f32 %v613, %v242
        %v1203 = vmul.f32 %v617, %v243
        %v1204 = vmul.f32 %v621, %v244
        %v1205 = vmul.f32 %v625, %v245
        %v1206 = vmul.f32 %v629, %v246
        %v1207 = vmul.f32 %v633, %v247
        %v1208 = vmul.f32 %v637, %v248
        %v1209 = vmul.f32 %v641, %v249
        %v1210 = vmul.f32 %v645, %v250
        %v1211 = vmul.f32 %v649, %v251
        %v1212 = vmul.f32 %v653, %v252
        %v1213 = vmul.f32 %v657, %v253
        %v1214 = vmul.f32 %v661, %v254
        %v1215 = vmul.f32 %v665, %v255
        %v1216 = vmul.f32 %v669, %v256
        %v1217 = vmul.f32 %v673, %v257
        %v1218 = vmul.f32 %v677, %v242
        %v1219 = vmul.f32 %v681, %v243
        %v1220 = vmul.f32 %v685, %v244
        %v1221 = vmul.f32 %v689, %v245
        %v1222 = vmul.f32 %v693, %v246
        %v1223 = vmul.f32 %v697, %v247
        %v1224 = vmul.f32 %v701, %v248
        %v1225 = vmul.f32 %v705, %v249
        %v1226 = vmul.f32 %v709, %v250
        %v1227 = vmul.f32 %v713, %v251
        %v1228 = vmul.f32 %v717, %v252
        %v1229 = vmul.f32 %v721, %v253
        %v1230 = vmul.f32 %v725, %v254
        %v1231 = vmul.f32 %v729, %v255
        %v1232 = vmul.f32 %v733, %v256
        %v1233 = vmul.f32 %v737, %v257
        %v1234 = vmul.f32 %v741, %v242
        %v1235 = vmul.f32 %v745, %v243
        %v1236 = vmul.f32 %v749, %v244
        %v1237 = vmul.f32 %v753, %v245
        %v1238 = vmul.f32 %v757, %v246
        %v1239 = vmul.f32 %v761, %v247
        %v1240 = vmul.f32 %v765, %v248
        %v1241 = vmul.f32 %v769, %v249
        %v1242 = vmul.f32 %v773, %v250
        %v1243 = vmul.f32 %v777, %v251
        %v1244 = vmul.f32 %v781, %v252
        %v1245 = vmul.f32 %v785, %v253
        %v1246 = vmul.f32 %v789, %v254
        %v1247 = vmul.f32 %v793, %v255
        %v1248 = vmul.f32 %v797, %v256
        %v1249 = vmul.f32 %v801, %v257
        %v1250 = vmul.f32 %v805, %v242
        %v1251 = vmul.f32 %v809, %v243
        %v1252 = vmul.f32 %v813, %v244
        %v1253 = vmul.f32 %v817, %v245
        %v1254 = vmul.f32 %v821, %v246
        %v1255 = vmul.f32 %v825, %v247
        %v1256 = vmul.f32 %v829, %v248
        %v1257 = vmul.f32 %v833, %v249
        %v1258 = vmul.f32 %v837, %v250
        %v1259 = vmul.f32 %v841, %v251
        %v1260 = vmul.f32 %v845, %v252
        %v1261 = vmul.f32 %v849, %v253
        %v1262 = vmul.f32 %v853, %v254
        %v1263 = vmul.f32 %v857, %v255
        %v1264 = vmul.f32 %v861, %v256
        %v1265 = vmul.f32 %v865, %v257
        %v1266 = vmul.f32 %v869, %v242
        %v1267 = vmul.f32 %v873, %v243
        %v1268 = vmul.f32 %v877, %v244
        %v1269 = vmul.f32 %v881, %v245
        %v1270 = vmul.f32 %v885, %v246
        %v1271 = vmul.f32 %v889, %v247
        %v1272 = vmul.f32 %v893, %v248
        %v1273 = vmul.f32 %v897, %v249
        %v1274 = vmul.f32 %v901, %v250
        %v1275 = vmul.f32 %v905, %v251
        %v1276 = vmul.f32 %v909, %v252
        %v1277 = vmul.f32 %v913, %v253
        %v1278 = vmul.f32 %v917, %v254
        %v1279 = vmul.f32 %v921, %v255
        %v1280 = vmul.f32 %v925, %v256
        %v1281 = vmul.f32 %v929, %v257
        %v1282 = vmul.f32 %v933, %v242
        %v1283 = vmul.f32 %v937, %v243
        %v1284 = vmul.f32 %v941, %v244
        %v1285 = vmul.f32 %v945, %v245
        %v1286 = vmul.f32 %v949, %v246
        %v1287 = vmul.f32 %v953, %v247
        %v1288 = vmul.f32 %v957, %v248
        %v1289 = vmul.f32 %v961, %v249
        %v1290 = vmul.f32 %v965, %v250
        %v1291 = vmul.f32 %v969, %v251
        %v1292 = vmul.f32 %v973, %v252
        %v1293 = vmul.f32 %v977, %v253
        %v1294 = vmul.f32 %v981, %v254
        %v1295 = vmul.f32 %v985, %v255
        %v1296 = vmul.f32 %v989, %v256
        %v1297 = vmul.f32 %v993, %v257
        %v1298 = vmul.f32 %v997, %v242
        %v1299 = vmul.f32 %v1001, %v243
        %v1300 = vmul.f32 %v1005, %v244
        %v1301 = vmul.f32 %v1009, %v245
        %v1302 = vmul.f32 %v1013, %v246
        %v1303 = vmul.f32 %v1017, %v247
        %v1304 = vmul.f32 %v1021, %v248
        %v1305 = vmul.f32 %v1025, %v249
        %v1306 = vmul.f32 %v1029, %v250
        %v1307 = vmul.f32 %v1033, %v251
        %v1308 = vmul.f32 %v1037, %v252
        %v1309 = vmul.f32 %v1041, %v253
        %v1310 = vmul.f32 %v1045, %v254
        %v1311 = vmul.f32 %v1049, %v255
        %v1312 = vmul.f32 %v1053, %v256
        %v1313 = vmul.f32 %v1057, %v257
        %v1314 = vld [vmem:[%s1] sm:$0xf]
        %v1315 = vpack.c.bf16 %v1202, %v1186
        %v1316 = vpack.c.bf16 %v1203, %v1187
        %v1317 = vpack.c.bf16 %v1204, %v1188
        %v1318 = vpack.c.bf16 %v1205, %v1189
        %v1319 = vpack.c.bf16 %v1206, %v1190
        %v1320 = vpack.c.bf16 %v1207, %v1191
        %v1321 = vpack.c.bf16 %v1208, %v1192
        %v1322 = vpack.c.bf16 %v1209, %v1193
        %v1323 = vpack.c.bf16 %v1210, %v1194
        %v1324 = vpack.c.bf16 %v1211, %v1195
        %v1325 = vpack.c.bf16 %v1212, %v1196
        %v1326 = vpack.c.bf16 %v1213, %v1197
        %v1327 = vpack.c.bf16 %v1214, %v1198
        %v1328 = vpack.c.bf16 %v1215, %v1199
        %v1329 = vpack.c.bf16 %v1216, %v1200
        %v1330 = vpack.c.bf16 %v1217, %v1201
        %v1331 = vpack.c.bf16 %v1234, %v1218
        %v1332 = vpack.c.bf16 %v1235, %v1219
        %v1333 = vpack.c.bf16 %v1236, %v1220
        %v1334 = vpack.c.bf16 %v1237, %v1221
        %v1335 = vpack.c.bf16 %v1238, %v1222
        %v1336 = vpack.c.bf16 %v1239, %v1223
        %v1337 = vpack.c.bf16 %v1240, %v1224
        %v1338 = vpack.c.bf16 %v1241, %v1225
        %v1339 = vpack.c.bf16 %v1242, %v1226
        %v1340 = vpack.c.bf16 %v1243, %v1227
        %v1341 = vpack.c.bf16 %v1244, %v1228
        %v1342 = vpack.c.bf16 %v1245, %v1229
        %v1343 = vpack.c.bf16 %v1246, %v1230
        %v1344 = vpack.c.bf16 %v1247, %v1231
        %v1345 = vpack.c.bf16 %v1248, %v1232
        %v1346 = vpack.c.bf16 %v1249, %v1233
        %v1347 = vpack.c.bf16 %v1266, %v1250
        %v1348 = vpack.c.bf16 %v1267, %v1251
        %v1349 = vpack.c.bf16 %v1268, %v1252
        %v1350 = vpack.c.bf16 %v1269, %v1253
        %v1351 = vpack.c.bf16 %v1270, %v1254
        %v1352 = vpack.c.bf16 %v1271, %v1255
        %v1353 = vpack.c.bf16 %v1272, %v1256
        %v1354 = vpack.c.bf16 %v1273, %v1257
        %v1355 = vpack.c.bf16 %v1274, %v1258
        %v1356 = vpack.c.bf16 %v1275, %v1259
        %v1357 = vpack.c.bf16 %v1276, %v1260
        %v1358 = vpack.c.bf16 %v1277, %v1261
        %v1359 = vpack.c.bf16 %v1278, %v1262
        %v1360 = vpack.c.bf16 %v1279, %v1263
        %v1361 = vpack.c.bf16 %v1280, %v1264
        %v1362 = vpack.c.bf16 %v1281, %v1265
        %v1363 = vpack.c.bf16 %v1298, %v1282
        %v1364 = vpack.c.bf16 %v1299, %v1283
        %v1365 = vpack.c.bf16 %v1300, %v1284
        %v1366 = vpack.c.bf16 %v1301, %v1285
        %v1367 = vpack.c.bf16 %v1302, %v1286
        %v1368 = vpack.c.bf16 %v1303, %v1287
        %v1369 = vpack.c.bf16 %v1304, %v1288
        %v1370 = vpack.c.bf16 %v1305, %v1289
        %v1371 = vpack.c.bf16 %v1306, %v1290
        %v1372 = vpack.c.bf16 %v1307, %v1291
        %v1373 = vpack.c.bf16 %v1308, %v1292
        %v1374 = vpack.c.bf16 %v1309, %v1293
        %v1375 = vpack.c.bf16 %v1310, %v1294
        %v1376 = vpack.c.bf16 %v1311, %v1295
        %v1377 = vpack.c.bf16 %v1312, %v1296
        %v1378 = vpack.c.bf16 %v1313, %v1297
        %vm1379 = vcmask 523264
        %v1381 = vsel %vm1379, %v1314, 0
        %1383 = vmatprep.subr.bf16.mxu0 %v1316
        %1384 = vmatpush1.bf16.msra.mxu0 %v1315
        %1385 = vmatprep.subr.bf16.mxu0 %v1332
        %1386 = vmatpush1.bf16.msra.mxu0 %v1331
        %1387 = vmatprep.subr.bf16.mxu0 %v1348
        %1388 = vmatpush1.bf16.msra.mxu0 %v1347
        %1389 = vmatprep.subr.bf16.mxu0 %v1364
        %1390 = vmatpush1.bf16.msra.mxu0 %v1363
        %1391 = vmatprep.subr.bf16.mxu0 0
        %1392 = vmatpush1.bf16.msra.mxu0 0
        %1393 = vmatprep.subr.bf16.mxu0 0
        %1394 = vmatpush1.bf16.msra.mxu0 0
        %1395 = vmatprep.subr.bf16.mxu0 0
        %1396 = vmatpush1.bf16.msra.mxu0 0
        %1397 = vmatprep.subr.bf16.mxu0 0
        %1398 = vmatpush1.bf16.msra.mxu0 0
        %1399 = vmatprep.subr.bf16.mxu0 0
        %1400 = vmatpush1.bf16.msra.mxu0 0
        %1401 = vmatprep.subr.bf16.mxu0 0
        %1402 = vmatpush1.bf16.msra.mxu0 0
        %1403 = vmatprep.subr.bf16.mxu0 0
        %1404 = vmatpush1.bf16.msra.mxu0 0
        %1405 = vmatprep.subr.bf16.mxu0 0
        %1406 = vmatpush1.bf16.msra.mxu0 0
        %1407 = vmatprep.subr.bf16.mxu0 0
        %1408 = vmatpush1.bf16.msra.mxu0 0
        %1409 = vmatprep.subr.bf16.mxu0 0
        %1410 = vmatpush1.bf16.msra.mxu0 0
        %1411 = vmatprep.subr.bf16.mxu0 0
        %1412 = vmatpush1.bf16.msra.mxu0 0
        %1413 = vmatprep.subr.bf16.mxu0 0
        %1414 = vmatpush1.bf16.msra.mxu0 0
        %1415 = vmatprep.mubr.bf16.mxu0 0
        %1416 = vmatmul.mubr.bf16.gmra.mrb[0].mxu0 %v1381
        %v1417 = vpop.f32.mrb[0].mxu0
        %v1418 = vadd.f32 0.0, %v1417
        %v1419 = vpop.f32.mrb[0].mxu0
        %v1420 = vadd.f32 0.0, %v1419
        %v1421 = vpop.f32.mrb[0].mxu0
        %v1422 = vpop.f32.mrb[0].mxu0
        %1423 = vdwg.mxu0
        %1424 = vmatprep.subr.bf16.mxu0 %v1318
        %1425 = vmatpush1.bf16.msra.mxu0 %v1317
        %1426 = vmatprep.subr.bf16.mxu0 %v1334
        %1427 = vmatpush1.bf16.msra.mxu0 %v1333
        %1428 = vmatprep.subr.bf16.mxu0 %v1350
        %1429 = vmatpush1.bf16.msra.mxu0 %v1349
        %1430 = vmatprep.subr.bf16.mxu0 %v1366
        %1431 = vmatpush1.bf16.msra.mxu0 %v1365
        %1432 = vmatprep.subr.bf16.mxu0 0
        %1433 = vmatpush1.bf16.msra.mxu0 0
        %1434 = vmatprep.subr.bf16.mxu0 0
        %1435 = vmatpush1.bf16.msra.mxu0 0
        %1436 = vmatprep.subr.bf16.mxu0 0
        %1437 = vmatpush1.bf16.msra.mxu0 0
        %1438 = vmatprep.subr.bf16.mxu0 0
        %1439 = vmatpush1.bf16.msra.mxu0 0
        %1440 = vmatprep.subr.bf16.mxu0 0
        %1441 = vmatpush1.bf16.msra.mxu0 0
        %1442 = vmatprep.subr.bf16.mxu0 0
        %1443 = vmatpush1.bf16.msra.mxu0 0
        %1444 = vmatprep.subr.bf16.mxu0 0
        %1445 = vmatpush1.bf16.msra.mxu0 0
        %1446 = vmatprep.subr.bf16.mxu0 0
        %1447 = vmatpush1.bf16.msra.mxu0 0
        %1448 = vmatprep.subr.bf16.mxu0 0
        %1449 = vmatpush1.bf16.msra.mxu0 0
        %1450 = vmatprep.subr.bf16.mxu0 0
        %1451 = vmatpush1.bf16.msra.mxu0 0
        %1452 = vmatprep.subr.bf16.mxu0 0
        %1453 = vmatpush1.bf16.msra.mxu0 0
        %1454 = vmatprep.subr.bf16.mxu0 0
        %1455 = vmatpush1.bf16.msra.mxu0 0
        %1456 = vmatprep.mubr.bf16.mxu0 0
        %1457 = vmatmul.mubr.bf16.gmra.mrb[0].mxu0 %v1381
        %v1458 = vpop.f32.mrb[0].mxu0
        %v1459 = vadd.f32 0.0, %v1458
        %v1460 = vpop.f32.mrb[0].mxu0
        %v1461 = vadd.f32 0.0, %v1460
        %v1462 = vpop.f32.mrb[0].mxu0
        %v1463 = vpop.f32.mrb[0].mxu0
        %1464 = vdwg.mxu0
        %1465 = vmatprep.subr.bf16.mxu0 %v1320
        %1466 = vmatpush1.bf16.msra.mxu0 %v1319
        %1467 = vmatprep.subr.bf16.mxu0 %v1336
        %1468 = vmatpush1.bf16.msra.mxu0 %v1335
        %1469 = vmatprep.subr.bf16.mxu0 %v1352
        %1470 = vmatpush1.bf16.msra.mxu0 %v1351
        %1471 = vmatprep.subr.bf16.mxu0 %v1368
        %1472 = vmatpush1.bf16.msra.mxu0 %v1367
        %1473 = vmatprep.subr.bf16.mxu0 0
        %1474 = vmatpush1.bf16.msra.mxu0 0
        %1475 = vmatprep.subr.bf16.mxu0 0
        %1476 = vmatpush1.bf16.msra.mxu0 0
        %1477 = vmatprep.subr.bf16.mxu0 0
        %1478 = vmatpush1.bf16.msra.mxu0 0
        %1479 = vmatprep.subr.bf16.mxu0 0
        %1480 = vmatpush1.bf16.msra.mxu0 0
        %1481 = vmatprep.subr.bf16.mxu0 0
        %1482 = vmatpush1.bf16.msra.mxu0 0
        %1483 = vmatprep.subr.bf16.mxu0 0
        %1484 = vmatpush1.bf16.msra.mxu0 0
        %1485 = vmatprep.subr.bf16.mxu0 0
        %1486 = vmatpush1.bf16.msra.mxu0 0
        %1487 = vmatprep.subr.bf16.mxu0 0
        %1488 = vmatpush1.bf16.msra.mxu0 0
        %1489 = vmatprep.subr.bf16.mxu0 0
        %1490 = vmatpush1.bf16.msra.mxu0 0
        %1491 = vmatprep.subr.bf16.mxu0 0
        %1492 = vmatpush1.bf16.msra.mxu0 0
        %1493 = vmatprep.subr.bf16.mxu0 0
        %1494 = vmatpush1.bf16.msra.mxu0 0
        %1495 = vmatprep.subr.bf16.mxu0 0
        %1496 = vmatpush1.bf16.msra.mxu0 0
        %1497 = vmatprep.mubr.bf16.mxu0 0
        %1498 = vmatmul.mubr.bf16.gmra.mrb[0].mxu0 %v1381
        %v1499 = vpop.f32.mrb[0].mxu0
        %v1500 = vadd.f32 0.0, %v1499
        %v1501 = vpop.f32.mrb[0].mxu0
        %v1502 = vadd.f32 0.0, %v1501
        %v1503 = vpop.f32.mrb[0].mxu0
        %v1504 = vpop.f32.mrb[0].mxu0
        %1505 = vdwg.mxu0
        %1506 = vmatprep.subr.bf16.mxu0 %v1322
        %1507 = vmatpush1.bf16.msra.mxu0 %v1321
        %1508 = vmatprep.subr.bf16.mxu0 %v1338
        %1509 = vmatpush1.bf16.msra.mxu0 %v1337
        %1510 = vmatprep.subr.bf16.mxu0 %v1354
        %1511 = vmatpush1.bf16.msra.mxu0 %v1353
        %1512 = vmatprep.subr.bf16.mxu0 %v1370
        %1513 = vmatpush1.bf16.msra.mxu0 %v1369
        %1514 = vmatprep.subr.bf16.mxu0 0
        %1515 = vmatpush1.bf16.msra.mxu0 0
        %1516 = vmatprep.subr.bf16.mxu0 0
        %1517 = vmatpush1.bf16.msra.mxu0 0
        %1518 = vmatprep.subr.bf16.mxu0 0
        %1519 = vmatpush1.bf16.msra.mxu0 0
        %1520 = vmatprep.subr.bf16.mxu0 0
        %1521 = vmatpush1.bf16.msra.mxu0 0
        %1522 = vmatprep.subr.bf16.mxu0 0
        %1523 = vmatpush1.bf16.msra.mxu0 0
        %1524 = vmatprep.subr.bf16.mxu0 0
        %1525 = vmatpush1.bf16.msra.mxu0 0
        %1526 = vmatprep.subr.bf16.mxu0 0
        %1527 = vmatpush1.bf16.msra.mxu0 0
        %1528 = vmatprep.subr.bf16.mxu0 0
        %1529 = vmatpush1.bf16.msra.mxu0 0
        %1530 = vmatprep.subr.bf16.mxu0 0
        %1531 = vmatpush1.bf16.msra.mxu0 0
        %1532 = vmatprep.subr.bf16.mxu0 0
        %1533 = vmatpush1.bf16.msra.mxu0 0
        %1534 = vmatprep.subr.bf16.mxu0 0
        %1535 = vmatpush1.bf16.msra.mxu0 0
        %1536 = vmatprep.subr.bf16.mxu0 0
        %1537 = vmatpush1.bf16.msra.mxu0 0
        %1538 = vmatprep.mubr.bf16.mxu0 0
        %1539 = vmatmul.mubr.bf16.gmra.mrb[0].mxu0 %v1381
        %v1540 = vpop.f32.mrb[0].mxu0
        %v1541 = vadd.f32 0.0, %v1540
        %v1542 = vpop.f32.mrb[0].mxu0
        %v1543 = vadd.f32 0.0, %v1542
        %v1544 = vpop.f32.mrb[0].mxu0
        %v1545 = vpop.f32.mrb[0].mxu0
        %1546 = vdwg.mxu0
        %1547 = vmatprep.subr.bf16.mxu0 %v1324
        %1548 = vmatpush1.bf16.msra.mxu0 %v1323
        %1549 = vmatprep.subr.bf16.mxu0 %v1340
        %1550 = vmatpush1.bf16.msra.mxu0 %v1339
        %1551 = vmatprep.subr.bf16.mxu0 %v1356
        %1552 = vmatpush1.bf16.msra.mxu0 %v1355
        %1553 = vmatprep.subr.bf16.mxu0 %v1372
        %1554 = vmatpush1.bf16.msra.mxu0 %v1371
        %1555 = vmatprep.subr.bf16.mxu0 0
        %1556 = vmatpush1.bf16.msra.mxu0 0
        %1557 = vmatprep.subr.bf16.mxu0 0
        %1558 = vmatpush1.bf16.msra.mxu0 0
        %1559 = vmatprep.subr.bf16.mxu0 0
        %1560 = vmatpush1.bf16.msra.mxu0 0
        %1561 = vmatprep.subr.bf16.mxu0 0
        %1562 = vmatpush1.bf16.msra.mxu0 0
        %1563 = vmatprep.subr.bf16.mxu0 0
        %1564 = vmatpush1.bf16.msra.mxu0 0
        %1565 = vmatprep.subr.bf16.mxu0 0
        %1566 = vmatpush1.bf16.msra.mxu0 0
        %1567 = vmatprep.subr.bf16.mxu0 0
        %1568 = vmatpush1.bf16.msra.mxu0 0
        %1569 = vmatprep.subr.bf16.mxu0 0
        %1570 = vmatpush1.bf16.msra.mxu0 0
        %1571 = vmatprep.subr.bf16.mxu0 0
        %1572 = vmatpush1.bf16.msra.mxu0 0
        %1573 = vmatprep.subr.bf16.mxu0 0
        %1574 = vmatpush1.bf16.msra.mxu0 0
        %1575 = vmatprep.subr.bf16.mxu0 0
        %1576 = vmatpush1.bf16.msra.mxu0 0
        %1577 = vmatprep.subr.bf16.mxu0 0
        %1578 = vmatpush1.bf16.msra.mxu0 0
        %1579 = vmatprep.mubr.bf16.mxu0 0
        %1580 = vmatmul.mubr.bf16.gmra.mrb[0].mxu0 %v1381
        %v1581 = vpop.f32.mrb[0].mxu0
        %v1582 = vadd.f32 0.0, %v1581
        %v1583 = vpop.f32.mrb[0].mxu0
        %v1584 = vadd.f32 0.0, %v1583
        %v1585 = vpop.f32.mrb[0].mxu0
        %v1586 = vpop.f32.mrb[0].mxu0
        %1587 = vdwg.mxu0
        %1588 = vmatprep.subr.bf16.mxu0 %v1326
        %1589 = vmatpush1.bf16.msra.mxu0 %v1325
        %1590 = vmatprep.subr.bf16.mxu0 %v1342
        %1591 = vmatpush1.bf16.msra.mxu0 %v1341
        %1592 = vmatprep.subr.bf16.mxu0 %v1358
        %1593 = vmatpush1.bf16.msra.mxu0 %v1357
        %1594 = vmatprep.subr.bf16.mxu0 %v1374
        %1595 = vmatpush1.bf16.msra.mxu0 %v1373
        %1596 = vmatprep.subr.bf16.mxu0 0
        %1597 = vmatpush1.bf16.msra.mxu0 0
        %1598 = vmatprep.subr.bf16.mxu0 0
        %1599 = vmatpush1.bf16.msra.mxu0 0
        %1600 = vmatprep.subr.bf16.mxu0 0
        %1601 = vmatpush1.bf16.msra.mxu0 0
        %1602 = vmatprep.subr.bf16.mxu0 0
        %1603 = vmatpush1.bf16.msra.mxu0 0
        %1604 = vmatprep.subr.bf16.mxu0 0
        %1605 = vmatpush1.bf16.msra.mxu0 0
        %1606 = vmatprep.subr.bf16.mxu0 0
        %1607 = vmatpush1.bf16.msra.mxu0 0
        %1608 = vmatprep.subr.bf16.mxu0 0
        %1609 = vmatpush1.bf16.msra.mxu0 0
        %1610 = vmatprep.subr.bf16.mxu0 0
        %1611 = vmatpush1.bf16.msra.mxu0 0
        %1612 = vmatprep.subr.bf16.mxu0 0
        %1613 = vmatpush1.bf16.msra.mxu0 0
        %1614 = vmatprep.subr.bf16.mxu0 0
        %1615 = vmatpush1.bf16.msra.mxu0 0
        %1616 = vmatprep.subr.bf16.mxu0 0
        %1617 = vmatpush1.bf16.msra.mxu0 0
        %1618 = vmatprep.subr.bf16.mxu0 0
        %1619 = vmatpush1.bf16.msra.mxu0 0
        %1620 = vmatprep.mubr.bf16.mxu0 0
        %1621 = vmatmul.mubr.bf16.gmra.mrb[0].mxu0 %v1381
        %v1622 = vpop.f32.mrb[0].mxu0
        %v1623 = vadd.f32 0.0, %v1622
        %v1624 = vpop.f32.mrb[0].mxu0
        %v1625 = vadd.f32 0.0, %v1624
        %v1626 = vpop.f32.mrb[0].mxu0
        %v1627 = vpop.f32.mrb[0].mxu0
        %1628 = vdwg.mxu0
        %1629 = vmatprep.subr.bf16.mxu0 %v1328
        %1630 = vmatpush1.bf16.msra.mxu0 %v1327
        %1631 = vmatprep.subr.bf16.mxu0 %v1344
        %1632 = vmatpush1.bf16.msra.mxu0 %v1343
        %1633 = vmatprep.subr.bf16.mxu0 %v1360
        %1634 = vmatpush1.bf16.msra.mxu0 %v1359
        %1635 = vmatprep.subr.bf16.mxu0 %v1376
        %1636 = vmatpush1.bf16.msra.mxu0 %v1375
        %1637 = vmatprep.subr.bf16.mxu0 0
        %1638 = vmatpush1.bf16.msra.mxu0 0
        %1639 = vmatprep.subr.bf16.mxu0 0
        %1640 = vmatpush1.bf16.msra.mxu0 0
        %1641 = vmatprep.subr.bf16.mxu0 0
        %1642 = vmatpush1.bf16.msra.mxu0 0
        %1643 = vmatprep.subr.bf16.mxu0 0
        %1644 = vmatpush1.bf16.msra.mxu0 0
        %1645 = vmatprep.subr.bf16.mxu0 0
        %1646 = vmatpush1.bf16.msra.mxu0 0
        %1647 = vmatprep.subr.bf16.mxu0 0
        %1648 = vmatpush1.bf16.msra.mxu0 0
        %1649 = vmatprep.subr.bf16.mxu0 0
        %1650 = vmatpush1.bf16.msra.mxu0 0
        %1651 = vmatprep.subr.bf16.mxu0 0
        %1652 = vmatpush1.bf16.msra.mxu0 0
        %1653 = vmatprep.subr.bf16.mxu0 0
        %1654 = vmatpush1.bf16.msra.mxu0 0
        %1655 = vmatprep.subr.bf16.mxu0 0
        %1656 = vmatpush1.bf16.msra.mxu0 0
        %1657 = vmatprep.subr.bf16.mxu0 0
        %1658 = vmatpush1.bf16.msra.mxu0 0
        %1659 = vmatprep.subr.bf16.mxu0 0
        %1660 = vmatpush1.bf16.msra.mxu0 0
        %1661 = vmatprep.mubr.bf16.mxu0 0
        %1662 = vmatmul.mubr.bf16.gmra.mrb[0].mxu0 %v1381
        %v1663 = vpop.f32.mrb[0].mxu0
        %v1664 = vadd.f32 0.0, %v1663
        %v1665 = vpop.f32.mrb[0].mxu0
        %v1666 = vadd.f32 0.0, %v1665
        %v1667 = vpop.f32.mrb[0].mxu0
        %v1668 = vpop.f32.mrb[0].mxu0
        %1669 = vdwg.mxu0
        %1670 = vmatprep.subr.bf16.mxu0 %v1330
        %1671 = vmatpush1.bf16.msra.mxu0 %v1329
        %1672 = vmatprep.subr.bf16.mxu0 %v1346
        %1673 = vmatpush1.bf16.msra.mxu0 %v1345
        %1674 = vmatprep.subr.bf16.mxu0 %v1362
        %1675 = vmatpush1.bf16.msra.mxu0 %v1361
        %1676 = vmatprep.subr.bf16.mxu0 %v1378
        %1677 = vmatpush1.bf16.msra.mxu0 %v1377
        %1678 = vmatprep.subr.bf16.mxu0 0
        %1679 = vmatpush1.bf16.msra.mxu0 0
        %1680 = vmatprep.subr.bf16.mxu0 0
        %1681 = vmatpush1.bf16.msra.mxu0 0
        %1682 = vmatprep.subr.bf16.mxu0 0
        %1683 = vmatpush1.bf16.msra.mxu0 0
        %1684 = vmatprep.subr.bf16.mxu0 0
        %1685 = vmatpush1.bf16.msra.mxu0 0
        %1686 = vmatprep.subr.bf16.mxu0 0
        %1687 = vmatpush1.bf16.msra.mxu0 0
        %1688 = vmatprep.subr.bf16.mxu0 0
        %1689 = vmatpush1.bf16.msra.mxu0 0
        %1690 = vmatprep.subr.bf16.mxu0 0
        %1691 = vmatpush1.bf16.msra.mxu0 0
        %1692 = vmatprep.subr.bf16.mxu0 0
        %1693 = vmatpush1.bf16.msra.mxu0 0
        %1694 = vmatprep.subr.bf16.mxu0 0
        %1695 = vmatpush1.bf16.msra.mxu0 0
        %1696 = vmatprep.subr.bf16.mxu0 0
        %1697 = vmatpush1.bf16.msra.mxu0 0
        %1698 = vmatprep.subr.bf16.mxu0 0
        %1699 = vmatpush1.bf16.msra.mxu0 0
        %1700 = vmatprep.subr.bf16.mxu0 0
        %1701 = vmatpush1.bf16.msra.mxu0 0
        %1702 = vmatprep.mubr.bf16.mxu0 0
        %1703 = vmatmul.mubr.bf16.gmra.mrb[0].mxu0 %v1381
        %v1704 = vpop.f32.mrb[0].mxu0
        %v1705 = vadd.f32 0.0, %v1704
        %v1706 = vpop.f32.mrb[0].mxu0
        %v1707 = vadd.f32 0.0, %v1706
        %v1708 = vpop.f32.mrb[0].mxu0
        %v1709 = vpop.f32.mrb[0].mxu0
        %1710 = vdwg.mxu0
        %v1711 = vld [vmem:[%s2] sm:$0xff]
        %1713 = vset.pattern.permute.xlu0 0
        %1714 = vperm.xlu0 %1713, %v1711
        %v1715 = vpop.permute.xlu0 %1714
        %v1717 = vadd.f32 %v1418, %v1715
        %v1718 = vadd.f32 %v1420, %v1715
        %v1719 = vadd.f32 %v1459, %v1715
        %v1720 = vadd.f32 %v1461, %v1715
        %v1721 = vadd.f32 %v1500, %v1715
        %v1722 = vadd.f32 %v1502, %v1715
        %v1723 = vadd.f32 %v1541, %v1715
        %v1724 = vadd.f32 %v1543, %v1715
        %v1725 = vadd.f32 %v1582, %v1715
        %v1726 = vadd.f32 %v1584, %v1715
        %v1727 = vadd.f32 %v1623, %v1715
        %v1728 = vadd.f32 %v1625, %v1715
        %v1729 = vadd.f32 %v1664, %v1715
        %v1730 = vadd.f32 %v1666, %v1715
        %v1731 = vadd.f32 %v1705, %v1715
        %v1732 = vadd.f32 %v1707, %v1715
        %v1733 = vadd.f32 %v1418, %v1420
        %v1734 = vadd.f32 %v1733, %v1459
        %v1735 = vadd.f32 %v1734, %v1461
        %v1736 = vadd.f32 %v1735, %v1500
        %v1737 = vadd.f32 %v1736, %v1502
        %v1738 = vadd.f32 %v1737, %v1541
        %v1739 = vadd.f32 %v1738, %v1543
        %v1740 = vadd.f32 %v1739, %v1582
        %v1741 = vadd.f32 %v1740, %v1584
        %v1742 = vadd.f32 %v1741, %v1623
        %v1743 = vadd.f32 %v1742, %v1625
        %v1744 = vadd.f32 %v1743, %v1664
        %v1745 = vadd.f32 %v1744, %v1666
        %v1746 = vadd.f32 %v1745, %v1705
        %v1747 = vadd.f32 %v1746, %v1707
        %v1764 = vcombine.low %v1717, %v1718
        %v1765 = vcombine.low %v1719, %v1720
        %v1766 = vcombine.low %v1721, %v1722
        %v1767 = vcombine.low %v1723, %v1724
        %v1769 = vunpack.c.l.s4 1966171168
        %v1770 = vunpack.c.0.s8 %v1769
        %v1771 = vlaneseq
        %v1772 = vshrl.u32 %v1771, 7
        %v1773 = vsub.s32 %v1770, %v1772
        %v1774 = vrot.slane %v1764, %v1773
        %v1776 = vunpack.c.l.s4 1966171168
        %v1777 = vunpack.c.0.s8 %v1776
        %v1778 = vlaneseq
        %v1779 = vshrl.u32 %v1778, 7
        %v1780 = vsub.s32 %v1777, %v1779
        %v1781 = vrot.slane %v1765, %v1780
        %v1783 = vunpack.c.l.s4 1966171168
        %v1784 = vunpack.c.0.s8 %v1783
        %v1785 = vlaneseq
        %v1786 = vshrl.u32 %v1785, 7
        %v1787 = vsub.s32 %v1784, %v1786
        %v1788 = vrot.slane %v1766, %v1787
        %v1790 = vunpack.c.l.s4 1966171168
        %v1791 = vunpack.c.0.s8 %v1790
        %v1792 = vlaneseq
        %v1793 = vshrl.u32 %v1792, 7
        %v1794 = vsub.s32 %v1791, %v1793
        %v1795 = vrot.slane %v1767, %v1794
        %v1796 = vcombine.low %v1774, %v1781
        %v1797 = vcombine.high %v1774, %v1781
        %v1798 = vcombine.low %v1788, %v1795
        %v1799 = vcombine.high %v1788, %v1795
        %v1801 = vunpack.c.l.s4 1966171168
        %v1802 = vunpack.c.0.s8 %v1801
        %v1803 = vlaneseq
        %v1804 = vshrl.u32 %v1803, 7
        %v1805 = vsub.s32 %v1802, %v1804
        %v1806 = vrot.slane %v1796, %v1805
        %v1808 = vunpack.c.l.s4 1966171168
        %v1809 = vunpack.c.0.s8 %v1808
        %v1810 = vlaneseq
        %v1811 = vshrl.u32 %v1810, 7
        %v1812 = vsub.s32 %v1809, %v1811
        %v1813 = vrot.slane %v1797, %v1812
        %v1815 = vunpack.c.l.s4 1966171168
        %v1816 = vunpack.c.0.s8 %v1815
        %v1817 = vlaneseq
        %v1818 = vshrl.u32 %v1817, 7
        %v1819 = vsub.s32 %v1816, %v1818
        %v1820 = vrot.slane %v1798, %v1819
        %v1822 = vunpack.c.l.s4 1966171168
        %v1823 = vunpack.c.0.s8 %v1822
        %v1824 = vlaneseq
        %v1825 = vshrl.u32 %v1824, 7
        %v1826 = vsub.s32 %v1823, %v1825
        %v1827 = vrot.slane %v1799, %v1826
        %v1828 = vcombine.low %v1806, %v1820
        %v1829 = vcombine.high %v1806, %v1820
        %v1830 = vcombine.low %v1813, %v1827
        %v1831 = vcombine.high %v1813, %v1827
        %v1832 = vcombine.low %v1725, %v1726
        %v1833 = vcombine.low %v1727, %v1728
        %v1834 = vcombine.low %v1729, %v1730
        %v1835 = vcombine.low %v1731, %v1732
        %v1837 = vunpack.c.l.s4 1966171168
        %v1838 = vunpack.c.0.s8 %v1837
        %v1839 = vlaneseq
        %v1840 = vshrl.u32 %v1839, 7
        %v1841 = vsub.s32 %v1838, %v1840
        %v1842 = vrot.slane %v1832, %v1841
        %v1844 = vunpack.c.l.s4 1966171168
        %v1845 = vunpack.c.0.s8 %v1844
        %v1846 = vlaneseq
        %v1847 = vshrl.u32 %v1846, 7
        %v1848 = vsub.s32 %v1845, %v1847
        %v1849 = vrot.slane %v1833, %v1848
        %v1851 = vunpack.c.l.s4 1966171168
        %v1852 = vunpack.c.0.s8 %v1851
        %v1853 = vlaneseq
        %v1854 = vshrl.u32 %v1853, 7
        %v1855 = vsub.s32 %v1852, %v1854
        %v1856 = vrot.slane %v1834, %v1855
        %v1858 = vunpack.c.l.s4 1966171168
        %v1859 = vunpack.c.0.s8 %v1858
        %v1860 = vlaneseq
        %v1861 = vshrl.u32 %v1860, 7
        %v1862 = vsub.s32 %v1859, %v1861
        %v1863 = vrot.slane %v1835, %v1862
        %v1864 = vcombine.low %v1842, %v1849
        %v1865 = vcombine.high %v1842, %v1849
        %v1866 = vcombine.low %v1856, %v1863
        %v1867 = vcombine.high %v1856, %v1863
        %v1869 = vunpack.c.l.s4 1966171168
        %v1870 = vunpack.c.0.s8 %v1869
        %v1871 = vlaneseq
        %v1872 = vshrl.u32 %v1871, 7
        %v1873 = vsub.s32 %v1870, %v1872
        %v1874 = vrot.slane %v1864, %v1873
        %v1876 = vunpack.c.l.s4 1966171168
        %v1877 = vunpack.c.0.s8 %v1876
        %v1878 = vlaneseq
        %v1879 = vshrl.u32 %v1878, 7
        %v1880 = vsub.s32 %v1877, %v1879
        %v1881 = vrot.slane %v1865, %v1880
        %v1883 = vunpack.c.l.s4 1966171168
        %v1884 = vunpack.c.0.s8 %v1883
        %v1885 = vlaneseq
        %v1886 = vshrl.u32 %v1885, 7
        %v1887 = vsub.s32 %v1884, %v1886
        %v1888 = vrot.slane %v1866, %v1887
        %v1890 = vunpack.c.l.s4 1966171168
        %v1891 = vunpack.c.0.s8 %v1890
        %v1892 = vlaneseq
        %v1893 = vshrl.u32 %v1892, 7
        %v1894 = vsub.s32 %v1891, %v1893
        %v1895 = vrot.slane %v1867, %v1894
        %v1896 = vcombine.low %v1874, %v1888
        %v1897 = vcombine.high %v1874, %v1888
        %v1898 = vcombine.low %v1881, %v1895
        %v1899 = vcombine.high %v1881, %v1895
        %v1900 = vlaneseq
        %v1901 = vshrl.u32 %v1900, 7
        %v1902 = vsub.s32 0, %v1901
        %v1903 = vrot.slane %v1828, %v1902
        %v1904 = vlaneseq
        %v1905 = vshrl.u32 %v1904, 7
        %v1906 = vsub.s32 1, %v1905
        %v1907 = vrot.slane %v1828, %v1906
        %v1908 = vlaneseq
        %v1909 = vshrl.u32 %v1908, 7
        %v1910 = vsub.s32 2, %v1909
        %v1911 = vrot.slane %v1828, %v1910
        %v1912 = vlaneseq
        %v1913 = vshrl.u32 %v1912, 7
        %v1914 = vsub.s32 3, %v1913
        %v1915 = vrot.slane %v1828, %v1914
        %v1916 = vlaneseq
        %v1917 = vshrl.u32 %v1916, 7
        %v1918 = vsub.s32 4, %v1917
        %v1919 = vrot.slane %v1828, %v1918
        %v1920 = vlaneseq
        %v1921 = vshrl.u32 %v1920, 7
        %v1922 = vsub.s32 5, %v1921
        %v1923 = vrot.slane %v1828, %v1922
        %v1924 = vlaneseq
        %v1925 = vshrl.u32 %v1924, 7
        %v1926 = vsub.s32 6, %v1925
        %v1927 = vrot.slane %v1828, %v1926
        %v1928 = vlaneseq
        %v1929 = vshrl.u32 %v1928, 7
        %v1930 = vsub.s32 7, %v1929
        %v1931 = vrot.slane %v1828, %v1930
        %v1932 = vlaneseq
        %v1933 = vshrl.u32 %v1932, 7
        %v1934 = vsub.s32 0, %v1933
        %v1935 = vrot.slane %v1896, %v1934
        %v1936 = vlaneseq
        %v1937 = vshrl.u32 %v1936, 7
        %v1938 = vsub.s32 1, %v1937
        %v1939 = vrot.slane %v1896, %v1938
        %v1940 = vlaneseq
        %v1941 = vshrl.u32 %v1940, 7
        %v1942 = vsub.s32 2, %v1941
        %v1943 = vrot.slane %v1896, %v1942
        %v1944 = vlaneseq
        %v1945 = vshrl.u32 %v1944, 7
        %v1946 = vsub.s32 3, %v1945
        %v1947 = vrot.slane %v1896, %v1946
        %v1948 = vlaneseq
        %v1949 = vshrl.u32 %v1948, 7
        %v1950 = vsub.s32 4, %v1949
        %v1951 = vrot.slane %v1896, %v1950
        %v1952 = vlaneseq
        %v1953 = vshrl.u32 %v1952, 7
        %v1954 = vsub.s32 5, %v1953
        %v1955 = vrot.slane %v1896, %v1954
        %v1956 = vlaneseq
        %v1957 = vshrl.u32 %v1956, 7
        %v1958 = vsub.s32 6, %v1957
        %v1959 = vrot.slane %v1896, %v1958
        %v1960 = vlaneseq
        %v1961 = vshrl.u32 %v1960, 7
        %v1962 = vsub.s32 7, %v1961
        %v1963 = vrot.slane %v1896, %v1962
        %v1964 = vlaneseq
        %v1965 = vshrl.u32 %v1964, 7
        %v1966 = vsub.s32 0, %v1965
        %v1967 = vrot.slane %v1830, %v1966
        %v1968 = vlaneseq
        %v1969 = vshrl.u32 %v1968, 7
        %v1970 = vsub.s32 1, %v1969
        %v1971 = vrot.slane %v1830, %v1970
        %v1972 = vlaneseq
        %v1973 = vshrl.u32 %v1972, 7
        %v1974 = vsub.s32 2, %v1973
        %v1975 = vrot.slane %v1830, %v1974
        %v1976 = vlaneseq
        %v1977 = vshrl.u32 %v1976, 7
        %v1978 = vsub.s32 3, %v1977
        %v1979 = vrot.slane %v1830, %v1978
        %v1980 = vlaneseq
        %v1981 = vshrl.u32 %v1980, 7
        %v1982 = vsub.s32 4, %v1981
        %v1983 = vrot.slane %v1830, %v1982
        %v1984 = vlaneseq
        %v1985 = vshrl.u32 %v1984, 7
        %v1986 = vsub.s32 5, %v1985
        %v1987 = vrot.slane %v1830, %v1986
        %v1988 = vlaneseq
        %v1989 = vshrl.u32 %v1988, 7
        %v1990 = vsub.s32 6, %v1989
        %v1991 = vrot.slane %v1830, %v1990
        %v1992 = vlaneseq
        %v1993 = vshrl.u32 %v1992, 7
        %v1994 = vsub.s32 7, %v1993
        %v1995 = vrot.slane %v1830, %v1994
        %v1996 = vlaneseq
        %v1997 = vshrl.u32 %v1996, 7
        %v1998 = vsub.s32 0, %v1997
        %v1999 = vrot.slane %v1898, %v1998
        %v2000 = vlaneseq
        %v2001 = vshrl.u32 %v2000, 7
        %v2002 = vsub.s32 1, %v2001
        %v2003 = vrot.slane %v1898, %v2002
        %v2004 = vlaneseq
        %v2005 = vshrl.u32 %v2004, 7
        %v2006 = vsub.s32 2, %v2005
        %v2007 = vrot.slane %v1898, %v2006
        %v2008 = vlaneseq
        %v2009 = vshrl.u32 %v2008, 7
        %v2010 = vsub.s32 3, %v2009
        %v2011 = vrot.slane %v1898, %v2010
        %v2012 = vlaneseq
        %v2013 = vshrl.u32 %v2012, 7
        %v2014 = vsub.s32 4, %v2013
        %v2015 = vrot.slane %v1898, %v2014
        %v2016 = vlaneseq
        %v2017 = vshrl.u32 %v2016, 7
        %v2018 = vsub.s32 5, %v2017
        %v2019 = vrot.slane %v1898, %v2018
        %v2020 = vlaneseq
        %v2021 = vshrl.u32 %v2020, 7
        %v2022 = vsub.s32 6, %v2021
        %v2023 = vrot.slane %v1898, %v2022
        %v2024 = vlaneseq
        %v2025 = vshrl.u32 %v2024, 7
        %v2026 = vsub.s32 7, %v2025
        %v2027 = vrot.slane %v1898, %v2026
        %v2028 = vlaneseq
        %v2029 = vshrl.u32 %v2028, 7
        %v2030 = vsub.s32 0, %v2029
        %v2031 = vrot.slane %v1829, %v2030
        %v2032 = vlaneseq
        %v2033 = vshrl.u32 %v2032, 7
        %v2034 = vsub.s32 1, %v2033
        %v2035 = vrot.slane %v1829, %v2034
        %v2036 = vlaneseq
        %v2037 = vshrl.u32 %v2036, 7
        %v2038 = vsub.s32 2, %v2037
        %v2039 = vrot.slane %v1829, %v2038
        %v2040 = vlaneseq
        %v2041 = vshrl.u32 %v2040, 7
        %v2042 = vsub.s32 3, %v2041
        %v2043 = vrot.slane %v1829, %v2042
        %v2044 = vlaneseq
        %v2045 = vshrl.u32 %v2044, 7
        %v2046 = vsub.s32 4, %v2045
        %v2047 = vrot.slane %v1829, %v2046
        %v2048 = vlaneseq
        %v2049 = vshrl.u32 %v2048, 7
        %v2050 = vsub.s32 5, %v2049
        %v2051 = vrot.slane %v1829, %v2050
        %v2052 = vlaneseq
        %v2053 = vshrl.u32 %v2052, 7
        %v2054 = vsub.s32 6, %v2053
        %v2055 = vrot.slane %v1829, %v2054
        %v2056 = vlaneseq
        %v2057 = vshrl.u32 %v2056, 7
        %v2058 = vsub.s32 7, %v2057
        %v2059 = vrot.slane %v1829, %v2058
        %v2060 = vlaneseq
        %v2061 = vshrl.u32 %v2060, 7
        %v2062 = vsub.s32 0, %v2061
        %v2063 = vrot.slane %v1897, %v2062
        %v2064 = vlaneseq
        %v2065 = vshrl.u32 %v2064, 7
        %v2066 = vsub.s32 1, %v2065
        %v2067 = vrot.slane %v1897, %v2066
        %v2068 = vlaneseq
        %v2069 = vshrl.u32 %v2068, 7
        %v2070 = vsub.s32 2, %v2069
        %v2071 = vrot.slane %v1897, %v2070
        %v2072 = vlaneseq
        %v2073 = vshrl.u32 %v2072, 7
        %v2074 = vsub.s32 3, %v2073
        %v2075 = vrot.slane %v1897, %v2074
        %v2076 = vlaneseq
        %v2077 = vshrl.u32 %v2076, 7
        %v2078 = vsub.s32 4, %v2077
        %v2079 = vrot.slane %v1897, %v2078
        %v2080 = vlaneseq
        %v2081 = vshrl.u32 %v2080, 7
        %v2082 = vsub.s32 5, %v2081
        %v2083 = vrot.slane %v1897, %v2082
        %v2084 = vlaneseq
        %v2085 = vshrl.u32 %v2084, 7
        %v2086 = vsub.s32 6, %v2085
        %v2087 = vrot.slane %v1897, %v2086
        %v2088 = vlaneseq
        %v2089 = vshrl.u32 %v2088, 7
        %v2090 = vsub.s32 7, %v2089
        %v2091 = vrot.slane %v1897, %v2090
        %v2092 = vlaneseq
        %v2093 = vshrl.u32 %v2092, 7
        %v2094 = vsub.s32 0, %v2093
        %v2095 = vrot.slane %v1831, %v2094
        %v2096 = vlaneseq
        %v2097 = vshrl.u32 %v2096, 7
        %v2098 = vsub.s32 1, %v2097
        %v2099 = vrot.slane %v1831, %v2098
        %v2100 = vlaneseq
        %v2101 = vshrl.u32 %v2100, 7
        %v2102 = vsub.s32 2, %v2101
        %v2103 = vrot.slane %v1831, %v2102
        %v2104 = vlaneseq
        %v2105 = vshrl.u32 %v2104, 7
        %v2106 = vsub.s32 3, %v2105
        %v2107 = vrot.slane %v1831, %v2106
        %v2108 = vlaneseq
        %v2109 = vshrl.u32 %v2108, 7
        %v2110 = vsub.s32 4, %v2109
        %v2111 = vrot.slane %v1831, %v2110
        %v2112 = vlaneseq
        %v2113 = vshrl.u32 %v2112, 7
        %v2114 = vsub.s32 5, %v2113
        %v2115 = vrot.slane %v1831, %v2114
        %v2116 = vlaneseq
        %v2117 = vshrl.u32 %v2116, 7
        %v2118 = vsub.s32 6, %v2117
        %v2119 = vrot.slane %v1831, %v2118
        %v2120 = vlaneseq
        %v2121 = vshrl.u32 %v2120, 7
        %v2122 = vsub.s32 7, %v2121
        %v2123 = vrot.slane %v1831, %v2122
        %v2124 = vlaneseq
        %v2125 = vshrl.u32 %v2124, 7
        %v2126 = vsub.s32 0, %v2125
        %v2127 = vrot.slane %v1899, %v2126
        %v2128 = vlaneseq
        %v2129 = vshrl.u32 %v2128, 7
        %v2130 = vsub.s32 1, %v2129
        %v2131 = vrot.slane %v1899, %v2130
        %v2132 = vlaneseq
        %v2133 = vshrl.u32 %v2132, 7
        %v2134 = vsub.s32 2, %v2133
        %v2135 = vrot.slane %v1899, %v2134
        %v2136 = vlaneseq
        %v2137 = vshrl.u32 %v2136, 7
        %v2138 = vsub.s32 3, %v2137
        %v2139 = vrot.slane %v1899, %v2138
        %v2140 = vlaneseq
        %v2141 = vshrl.u32 %v2140, 7
        %v2142 = vsub.s32 4, %v2141
        %v2143 = vrot.slane %v1899, %v2142
        %v2144 = vlaneseq
        %v2145 = vshrl.u32 %v2144, 7
        %v2146 = vsub.s32 5, %v2145
        %v2147 = vrot.slane %v1899, %v2146
        %v2148 = vlaneseq
        %v2149 = vshrl.u32 %v2148, 7
        %v2150 = vsub.s32 6, %v2149
        %v2151 = vrot.slane %v1899, %v2150
        %v2152 = vlaneseq
        %v2153 = vshrl.u32 %v2152, 7
        %v2154 = vsub.s32 7, %v2153
        %v2155 = vrot.slane %v1899, %v2154
        %v2220 = vmul.f32 %v1903, %v242
        %v2221 = vmul.f32 %v1907, %v243
        %v2222 = vmul.f32 %v1911, %v244
        %v2223 = vmul.f32 %v1915, %v245
        %v2224 = vmul.f32 %v1919, %v246
        %v2225 = vmul.f32 %v1923, %v247
        %v2226 = vmul.f32 %v1927, %v248
        %v2227 = vmul.f32 %v1931, %v249
        %v2228 = vmul.f32 %v1935, %v250
        %v2229 = vmul.f32 %v1939, %v251
        %v2230 = vmul.f32 %v1943, %v252
        %v2231 = vmul.f32 %v1947, %v253
        %v2232 = vmul.f32 %v1951, %v254
        %v2233 = vmul.f32 %v1955, %v255
        %v2234 = vmul.f32 %v1959, %v256
        %v2235 = vmul.f32 %v1963, %v257
        %v2236 = vmul.f32 %v1967, %v242
        %v2237 = vmul.f32 %v1971, %v243
        %v2238 = vmul.f32 %v1975, %v244
        %v2239 = vmul.f32 %v1979, %v245
        %v2240 = vmul.f32 %v1983, %v246
        %v2241 = vmul.f32 %v1987, %v247
        %v2242 = vmul.f32 %v1991, %v248
        %v2243 = vmul.f32 %v1995, %v249
        %v2244 = vmul.f32 %v1999, %v250
        %v2245 = vmul.f32 %v2003, %v251
        %v2246 = vmul.f32 %v2007, %v252
        %v2247 = vmul.f32 %v2011, %v253
        %v2248 = vmul.f32 %v2015, %v254
        %v2249 = vmul.f32 %v2019, %v255
        %v2250 = vmul.f32 %v2023, %v256
        %v2251 = vmul.f32 %v2027, %v257
        %v2252 = vmul.f32 %v2031, %v242
        %v2253 = vmul.f32 %v2035, %v243
        %v2254 = vmul.f32 %v2039, %v244
        %v2255 = vmul.f32 %v2043, %v245
        %v2256 = vmul.f32 %v2047, %v246
        %v2257 = vmul.f32 %v2051, %v247
        %v2258 = vmul.f32 %v2055, %v248
        %v2259 = vmul.f32 %v2059, %v249
        %v2260 = vmul.f32 %v2063, %v250
        %v2261 = vmul.f32 %v2067, %v251
        %v2262 = vmul.f32 %v2071, %v252
        %v2263 = vmul.f32 %v2075, %v253
        %v2264 = vmul.f32 %v2079, %v254
        %v2265 = vmul.f32 %v2083, %v255
        %v2266 = vmul.f32 %v2087, %v256
        %v2267 = vmul.f32 %v2091, %v257
        %v2268 = vmul.f32 %v2095, %v242
        %v2269 = vmul.f32 %v2099, %v243
        %v2270 = vmul.f32 %v2103, %v244
        %v2271 = vmul.f32 %v2107, %v245
        %v2272 = vmul.f32 %v2111, %v246
        %v2273 = vmul.f32 %v2115, %v247
        %v2274 = vmul.f32 %v2119, %v248
        %v2275 = vmul.f32 %v2123, %v249
        %v2276 = vmul.f32 %v2127, %v250
        %v2277 = vmul.f32 %v2131, %v251
        %v2278 = vmul.f32 %v2135, %v252
        %v2279 = vmul.f32 %v2139, %v253
        %v2280 = vmul.f32 %v2143, %v254
        %v2281 = vmul.f32 %v2147, %v255
        %v2282 = vmul.f32 %v2151, %v256
        %v2283 = vmul.f32 %v2155, %v257
        %v2284 = vld [vmem:[%s3] sm:$0xf]
        %v2285 = vpack.c.bf16 %v2236, %v2220
        %v2286 = vpack.c.bf16 %v2237, %v2221
        %v2287 = vpack.c.bf16 %v2238, %v2222
        %v2288 = vpack.c.bf16 %v2239, %v2223
        %v2289 = vpack.c.bf16 %v2240, %v2224
        %v2290 = vpack.c.bf16 %v2241, %v2225
        %v2291 = vpack.c.bf16 %v2242, %v2226
        %v2292 = vpack.c.bf16 %v2243, %v2227
        %v2293 = vpack.c.bf16 %v2244, %v2228
        %v2294 = vpack.c.bf16 %v2245, %v2229
        %v2295 = vpack.c.bf16 %v2246, %v2230
        %v2296 = vpack.c.bf16 %v2247, %v2231
        %v2297 = vpack.c.bf16 %v2248, %v2232
        %v2298 = vpack.c.bf16 %v2249, %v2233
        %v2299 = vpack.c.bf16 %v2250, %v2234
        %v2300 = vpack.c.bf16 %v2251, %v2235
        %v2301 = vpack.c.bf16 %v2268, %v2252
        %v2302 = vpack.c.bf16 %v2269, %v2253
        %v2303 = vpack.c.bf16 %v2270, %v2254
        %v2304 = vpack.c.bf16 %v2271, %v2255
        %v2305 = vpack.c.bf16 %v2272, %v2256
        %v2306 = vpack.c.bf16 %v2273, %v2257
        %v2307 = vpack.c.bf16 %v2274, %v2258
        %v2308 = vpack.c.bf16 %v2275, %v2259
        %v2309 = vpack.c.bf16 %v2276, %v2260
        %v2310 = vpack.c.bf16 %v2277, %v2261
        %v2311 = vpack.c.bf16 %v2278, %v2262
        %v2312 = vpack.c.bf16 %v2279, %v2263
        %v2313 = vpack.c.bf16 %v2280, %v2264
        %v2314 = vpack.c.bf16 %v2281, %v2265
        %v2315 = vpack.c.bf16 %v2282, %v2266
        %v2316 = vpack.c.bf16 %v2283, %v2267
        %vm2317 = vcmask 261120
        %v2319 = vsel %vm2317, %v2284, 0
        %2321 = vmatprep.subr.bf16.mxu0 %v2286
        %2322 = vmatpush1.bf16.msra.mxu0 %v2285
        %2323 = vmatprep.subr.bf16.mxu0 %v2302
        %2324 = vmatpush1.bf16.msra.mxu0 %v2301
        %2325 = vmatprep.subr.bf16.mxu0 0
        %2326 = vmatpush1.bf16.msra.mxu0 0
        %2327 = vmatprep.subr.bf16.mxu0 0
        %2328 = vmatpush1.bf16.msra.mxu0 0
        %2329 = vmatprep.subr.bf16.mxu0 0
        %2330 = vmatpush1.bf16.msra.mxu0 0
        %2331 = vmatprep.subr.bf16.mxu0 0
        %2332 = vmatpush1.bf16.msra.mxu0 0
        %2333 = vmatprep.subr.bf16.mxu0 0
        %2334 = vmatpush1.bf16.msra.mxu0 0
        %2335 = vmatprep.subr.bf16.mxu0 0
        %2336 = vmatpush1.bf16.msra.mxu0 0
        %2337 = vmatprep.subr.bf16.mxu0 0
        %2338 = vmatpush1.bf16.msra.mxu0 0
        %2339 = vmatprep.subr.bf16.mxu0 0
        %2340 = vmatpush1.bf16.msra.mxu0 0
        %2341 = vmatprep.subr.bf16.mxu0 0
        %2342 = vmatpush1.bf16.msra.mxu0 0
        %2343 = vmatprep.subr.bf16.mxu0 0
        %2344 = vmatpush1.bf16.msra.mxu0 0
        %2345 = vmatprep.subr.bf16.mxu0 0
        %2346 = vmatpush1.bf16.msra.mxu0 0
        %2347 = vmatprep.subr.bf16.mxu0 0
        %2348 = vmatpush1.bf16.msra.mxu0 0
        %2349 = vmatprep.subr.bf16.mxu0 0
        %2350 = vmatpush1.bf16.msra.mxu0 0
        %2351 = vmatprep.subr.bf16.mxu0 0
        %2352 = vmatpush1.bf16.msra.mxu0 0
        %2353 = vmatprep.mubr.bf16.mxu0 0
        %2354 = vmatmul.mubr.bf16.gmra.mrb[0].mxu0 %v2319
        %v2355 = vpop.f32.mrb[0].mxu0
        %v2356 = vadd.f32 0.0, %v2355
        %v2357 = vpop.f32.mrb[0].mxu0
        %v2358 = vadd.f32 0.0, %v2357
        %v2359 = vpop.f32.mrb[0].mxu0
        %v2360 = vpop.f32.mrb[0].mxu0
        %2361 = vdwg.mxu0
        %2362 = vmatprep.subr.bf16.mxu0 %v2288
        %2363 = vmatpush1.bf16.msra.mxu0 %v2287
        %2364 = vmatprep.subr.bf16.mxu0 %v2304
        %2365 = vmatpush1.bf16.msra.mxu0 %v2303
        %2366 = vmatprep.subr.bf16.mxu0 0
        %2367 = vmatpush1.bf16.msra.mxu0 0
        %2368 = vmatprep.subr.bf16.mxu0 0
        %2369 = vmatpush1.bf16.msra.mxu0 0
        %2370 = vmatprep.subr.bf16.mxu0 0
        %2371 = vmatpush1.bf16.msra.mxu0 0
        %2372 = vmatprep.subr.bf16.mxu0 0
        %2373 = vmatpush1.bf16.msra.mxu0 0
        %2374 = vmatprep.subr.bf16.mxu0 0
        %2375 = vmatpush1.bf16.msra.mxu0 0
        %2376 = vmatprep.subr.bf16.mxu0 0
        %2377 = vmatpush1.bf16.msra.mxu0 0
        %2378 = vmatprep.subr.bf16.mxu0 0
        %2379 = vmatpush1.bf16.msra.mxu0 0
        %2380 = vmatprep.subr.bf16.mxu0 0
        %2381 = vmatpush1.bf16.msra.mxu0 0
        %2382 = vmatprep.subr.bf16.mxu0 0
        %2383 = vmatpush1.bf16.msra.mxu0 0
        %2384 = vmatprep.subr.bf16.mxu0 0
        %2385 = vmatpush1.bf16.msra.mxu0 0
        %2386 = vmatprep.subr.bf16.mxu0 0
        %2387 = vmatpush1.bf16.msra.mxu0 0
        %2388 = vmatprep.subr.bf16.mxu0 0
        %2389 = vmatpush1.bf16.msra.mxu0 0
        %2390 = vmatprep.subr.bf16.mxu0 0
        %2391 = vmatpush1.bf16.msra.mxu0 0
        %2392 = vmatprep.subr.bf16.mxu0 0
        %2393 = vmatpush1.bf16.msra.mxu0 0
        %2394 = vmatprep.mubr.bf16.mxu0 0
        %2395 = vmatmul.mubr.bf16.gmra.mrb[0].mxu0 %v2319
        %v2396 = vpop.f32.mrb[0].mxu0
        %v2397 = vadd.f32 0.0, %v2396
        %v2398 = vpop.f32.mrb[0].mxu0
        %v2399 = vadd.f32 0.0, %v2398
        %v2400 = vpop.f32.mrb[0].mxu0
        %v2401 = vpop.f32.mrb[0].mxu0
        %2402 = vdwg.mxu0
        %2403 = vmatprep.subr.bf16.mxu0 %v2290
        %2404 = vmatpush1.bf16.msra.mxu0 %v2289
        %2405 = vmatprep.subr.bf16.mxu0 %v2306
        %2406 = vmatpush1.bf16.msra.mxu0 %v2305
        %2407 = vmatprep.subr.bf16.mxu0 0
        %2408 = vmatpush1.bf16.msra.mxu0 0
        %2409 = vmatprep.subr.bf16.mxu0 0
        %2410 = vmatpush1.bf16.msra.mxu0 0
        %2411 = vmatprep.subr.bf16.mxu0 0
        %2412 = vmatpush1.bf16.msra.mxu0 0
        %2413 = vmatprep.subr.bf16.mxu0 0
        %2414 = vmatpush1.bf16.msra.mxu0 0
        %2415 = vmatprep.subr.bf16.mxu0 0
        %2416 = vmatpush1.bf16.msra.mxu0 0
        %2417 = vmatprep.subr.bf16.mxu0 0
        %2418 = vmatpush1.bf16.msra.mxu0 0
        %2419 = vmatprep.subr.bf16.mxu0 0
        %2420 = vmatpush1.bf16.msra.mxu0 0
        %2421 = vmatprep.subr.bf16.mxu0 0
        %2422 = vmatpush1.bf16.msra.mxu0 0
        %2423 = vmatprep.subr.bf16.mxu0 0
        %2424 = vmatpush1.bf16.msra.mxu0 0
        %2425 = vmatprep.subr.bf16.mxu0 0
        %2426 = vmatpush1.bf16.msra.mxu0 0
        %2427 = vmatprep.subr.bf16.mxu0 0
        %2428 = vmatpush1.bf16.msra.mxu0 0
        %2429 = vmatprep.subr.bf16.mxu0 0
        %2430 = vmatpush1.bf16.msra.mxu0 0
        %2431 = vmatprep.subr.bf16.mxu0 0
        %2432 = vmatpush1.bf16.msra.mxu0 0
        %2433 = vmatprep.subr.bf16.mxu0 0
        %2434 = vmatpush1.bf16.msra.mxu0 0
        %2435 = vmatprep.mubr.bf16.mxu0 0
        %2436 = vmatmul.mubr.bf16.gmra.mrb[0].mxu0 %v2319
        %v2437 = vpop.f32.mrb[0].mxu0
        %v2438 = vadd.f32 0.0, %v2437
        %v2439 = vpop.f32.mrb[0].mxu0
        %v2440 = vadd.f32 0.0, %v2439
        %v2441 = vpop.f32.mrb[0].mxu0
        %v2442 = vpop.f32.mrb[0].mxu0
        %2443 = vdwg.mxu0
        %2444 = vmatprep.subr.bf16.mxu0 %v2292
        %2445 = vmatpush1.bf16.msra.mxu0 %v2291
        %2446 = vmatprep.subr.bf16.mxu0 %v2308
        %2447 = vmatpush1.bf16.msra.mxu0 %v2307
        %2448 = vmatprep.subr.bf16.mxu0 0
        %2449 = vmatpush1.bf16.msra.mxu0 0
        %2450 = vmatprep.subr.bf16.mxu0 0
        %2451 = vmatpush1.bf16.msra.mxu0 0
        %2452 = vmatprep.subr.bf16.mxu0 0
        %2453 = vmatpush1.bf16.msra.mxu0 0
        %2454 = vmatprep.subr.bf16.mxu0 0
        %2455 = vmatpush1.bf16.msra.mxu0 0
        %2456 = vmatprep.subr.bf16.mxu0 0
        %2457 = vmatpush1.bf16.msra.mxu0 0
        %2458 = vmatprep.subr.bf16.mxu0 0
        %2459 = vmatpush1.bf16.msra.mxu0 0
        %2460 = vmatprep.subr.bf16.mxu0 0
        %2461 = vmatpush1.bf16.msra.mxu0 0
        %2462 = vmatprep.subr.bf16.mxu0 0
        %2463 = vmatpush1.bf16.msra.mxu0 0
        %2464 = vmatprep.subr.bf16.mxu0 0
        %2465 = vmatpush1.bf16.msra.mxu0 0
        %2466 = vmatprep.subr.bf16.mxu0 0
        %2467 = vmatpush1.bf16.msra.mxu0 0
        %2468 = vmatprep.subr.bf16.mxu0 0
        %2469 = vmatpush1.bf16.msra.mxu0 0
        %2470 = vmatprep.subr.bf16.mxu0 0
        %2471 = vmatpush1.bf16.msra.mxu0 0
        %2472 = vmatprep.subr.bf16.mxu0 0
        %2473 = vmatpush1.bf16.msra.mxu0 0
        %2474 = vmatprep.subr.bf16.mxu0 0
        %2475 = vmatpush1.bf16.msra.mxu0 0
        %2476 = vmatprep.mubr.bf16.mxu0 0
        %2477 = vmatmul.mubr.bf16.gmra.mrb[0].mxu0 %v2319
        %v2478 = vpop.f32.mrb[0].mxu0
        %v2479 = vadd.f32 0.0, %v2478
        %v2480 = vpop.f32.mrb[0].mxu0
        %v2481 = vadd.f32 0.0, %v2480
        %v2482 = vpop.f32.mrb[0].mxu0
        %v2483 = vpop.f32.mrb[0].mxu0
        %2484 = vdwg.mxu0
        %2485 = vmatprep.subr.bf16.mxu0 %v2294
        %2486 = vmatpush1.bf16.msra.mxu0 %v2293
        %2487 = vmatprep.subr.bf16.mxu0 %v2310
        %2488 = vmatpush1.bf16.msra.mxu0 %v2309
        %2489 = vmatprep.subr.bf16.mxu0 0
        %2490 = vmatpush1.bf16.msra.mxu0 0
        %2491 = vmatprep.subr.bf16.mxu0 0
        %2492 = vmatpush1.bf16.msra.mxu0 0
        %2493 = vmatprep.subr.bf16.mxu0 0
        %2494 = vmatpush1.bf16.msra.mxu0 0
        %2495 = vmatprep.subr.bf16.mxu0 0
        %2496 = vmatpush1.bf16.msra.mxu0 0
        %2497 = vmatprep.subr.bf16.mxu0 0
        %2498 = vmatpush1.bf16.msra.mxu0 0
        %2499 = vmatprep.subr.bf16.mxu0 0
        %2500 = vmatpush1.bf16.msra.mxu0 0
        %2501 = vmatprep.subr.bf16.mxu0 0
        %2502 = vmatpush1.bf16.msra.mxu0 0
        %2503 = vmatprep.subr.bf16.mxu0 0
        %2504 = vmatpush1.bf16.msra.mxu0 0
        %2505 = vmatprep.subr.bf16.mxu0 0
        %2506 = vmatpush1.bf16.msra.mxu0 0
        %2507 = vmatprep.subr.bf16.mxu0 0
        %2508 = vmatpush1.bf16.msra.mxu0 0
        %2509 = vmatprep.subr.bf16.mxu0 0
        %2510 = vmatpush1.bf16.msra.mxu0 0
        %2511 = vmatprep.subr.bf16.mxu0 0
        %2512 = vmatpush1.bf16.msra.mxu0 0
        %2513 = vmatprep.subr.bf16.mxu0 0
        %2514 = vmatpush1.bf16.msra.mxu0 0
        %2515 = vmatprep.subr.bf16.mxu0 0
        %2516 = vmatpush1.bf16.msra.mxu0 0
        %2517 = vmatprep.mubr.bf16.mxu0 0
        %2518 = vmatmul.mubr.bf16.gmra.mrb[0].mxu0 %v2319
        %v2519 = vpop.f32.mrb[0].mxu0
        %v2520 = vadd.f32 0.0, %v2519
        %v2521 = vpop.f32.mrb[0].mxu0
        %v2522 = vadd.f32 0.0, %v2521
        %v2523 = vpop.f32.mrb[0].mxu0
        %v2524 = vpop.f32.mrb[0].mxu0
        %2525 = vdwg.mxu0
        %2526 = vmatprep.subr.bf16.mxu0 %v2296
        %2527 = vmatpush1.bf16.msra.mxu0 %v2295
        %2528 = vmatprep.subr.bf16.mxu0 %v2312
        %2529 = vmatpush1.bf16.msra.mxu0 %v2311
        %2530 = vmatprep.subr.bf16.mxu0 0
        %2531 = vmatpush1.bf16.msra.mxu0 0
        %2532 = vmatprep.subr.bf16.mxu0 0
        %2533 = vmatpush1.bf16.msra.mxu0 0
        %2534 = vmatprep.subr.bf16.mxu0 0
        %2535 = vmatpush1.bf16.msra.mxu0 0
        %2536 = vmatprep.subr.bf16.mxu0 0
        %2537 = vmatpush1.bf16.msra.mxu0 0
        %2538 = vmatprep.subr.bf16.mxu0 0
        %2539 = vmatpush1.bf16.msra.mxu0 0
        %2540 = vmatprep.subr.bf16.mxu0 0
        %2541 = vmatpush1.bf16.msra.mxu0 0
        %2542 = vmatprep.subr.bf16.mxu0 0
        %2543 = vmatpush1.bf16.msra.mxu0 0
        %2544 = vmatprep.subr.bf16.mxu0 0
        %2545 = vmatpush1.bf16.msra.mxu0 0
        %2546 = vmatprep.subr.bf16.mxu0 0
        %2547 = vmatpush1.bf16.msra.mxu0 0
        %2548 = vmatprep.subr.bf16.mxu0 0
        %2549 = vmatpush1.bf16.msra.mxu0 0
        %2550 = vmatprep.subr.bf16.mxu0 0
        %2551 = vmatpush1.bf16.msra.mxu0 0
        %2552 = vmatprep.subr.bf16.mxu0 0
        %2553 = vmatpush1.bf16.msra.mxu0 0
        %2554 = vmatprep.subr.bf16.mxu0 0
        %2555 = vmatpush1.bf16.msra.mxu0 0
        %2556 = vmatprep.subr.bf16.mxu0 0
        %2557 = vmatpush1.bf16.msra.mxu0 0
        %2558 = vmatprep.mubr.bf16.mxu0 0
        %2559 = vmatmul.mubr.bf16.gmra.mrb[0].mxu0 %v2319
        %v2560 = vpop.f32.mrb[0].mxu0
        %v2561 = vadd.f32 0.0, %v2560
        %v2562 = vpop.f32.mrb[0].mxu0
        %v2563 = vadd.f32 0.0, %v2562
        %v2564 = vpop.f32.mrb[0].mxu0
        %v2565 = vpop.f32.mrb[0].mxu0
        %2566 = vdwg.mxu0
        %2567 = vmatprep.subr.bf16.mxu0 %v2298
        %2568 = vmatpush1.bf16.msra.mxu0 %v2297
        %2569 = vmatprep.subr.bf16.mxu0 %v2314
        %2570 = vmatpush1.bf16.msra.mxu0 %v2313
        %2571 = vmatprep.subr.bf16.mxu0 0
        %2572 = vmatpush1.bf16.msra.mxu0 0
        %2573 = vmatprep.subr.bf16.mxu0 0
        %2574 = vmatpush1.bf16.msra.mxu0 0
        %2575 = vmatprep.subr.bf16.mxu0 0
        %2576 = vmatpush1.bf16.msra.mxu0 0
        %2577 = vmatprep.subr.bf16.mxu0 0
        %2578 = vmatpush1.bf16.msra.mxu0 0
        %2579 = vmatprep.subr.bf16.mxu0 0
        %2580 = vmatpush1.bf16.msra.mxu0 0
        %2581 = vmatprep.subr.bf16.mxu0 0
        %2582 = vmatpush1.bf16.msra.mxu0 0
        %2583 = vmatprep.subr.bf16.mxu0 0
        %2584 = vmatpush1.bf16.msra.mxu0 0
        %2585 = vmatprep.subr.bf16.mxu0 0
        %2586 = vmatpush1.bf16.msra.mxu0 0
        %2587 = vmatprep.subr.bf16.mxu0 0
        %2588 = vmatpush1.bf16.msra.mxu0 0
        %2589 = vmatprep.subr.bf16.mxu0 0
        %2590 = vmatpush1.bf16.msra.mxu0 0
        %2591 = vmatprep.subr.bf16.mxu0 0
        %2592 = vmatpush1.bf16.msra.mxu0 0
        %2593 = vmatprep.subr.bf16.mxu0 0
        %2594 = vmatpush1.bf16.msra.mxu0 0
        %2595 = vmatprep.subr.bf16.mxu0 0
        %2596 = vmatpush1.bf16.msra.mxu0 0
        %2597 = vmatprep.subr.bf16.mxu0 0
        %2598 = vmatpush1.bf16.msra.mxu0 0
        %2599 = vmatprep.mubr.bf16.mxu0 0
        %2600 = vmatmul.mubr.bf16.gmra.mrb[0].mxu0 %v2319
        %v2601 = vpop.f32.mrb[0].mxu0
        %v2602 = vadd.f32 0.0, %v2601
        %v2603 = vpop.f32.mrb[0].mxu0
        %v2604 = vadd.f32 0.0, %v2603
        %v2605 = vpop.f32.mrb[0].mxu0
        %v2606 = vpop.f32.mrb[0].mxu0
        %2607 = vdwg.mxu0
        %2608 = vmatprep.subr.bf16.mxu0 %v2300
        %2609 = vmatpush1.bf16.msra.mxu0 %v2299
        %2610 = vmatprep.subr.bf16.mxu0 %v2316
        %2611 = vmatpush1.bf16.msra.mxu0 %v2315
        %2612 = vmatprep.subr.bf16.mxu0 0
        %2613 = vmatpush1.bf16.msra.mxu0 0
        %2614 = vmatprep.subr.bf16.mxu0 0
        %2615 = vmatpush1.bf16.msra.mxu0 0
        %2616 = vmatprep.subr.bf16.mxu0 0
        %2617 = vmatpush1.bf16.msra.mxu0 0
        %2618 = vmatprep.subr.bf16.mxu0 0
        %2619 = vmatpush1.bf16.msra.mxu0 0
        %2620 = vmatprep.subr.bf16.mxu0 0
        %2621 = vmatpush1.bf16.msra.mxu0 0
        %2622 = vmatprep.subr.bf16.mxu0 0
        %2623 = vmatpush1.bf16.msra.mxu0 0
        %2624 = vmatprep.subr.bf16.mxu0 0
        %2625 = vmatpush1.bf16.msra.mxu0 0
        %2626 = vmatprep.subr.bf16.mxu0 0
        %2627 = vmatpush1.bf16.msra.mxu0 0
        %2628 = vmatprep.subr.bf16.mxu0 0
        %2629 = vmatpush1.bf16.msra.mxu0 0
        %2630 = vmatprep.subr.bf16.mxu0 0
        %2631 = vmatpush1.bf16.msra.mxu0 0
        %2632 = vmatprep.subr.bf16.mxu0 0
        %2633 = vmatpush1.bf16.msra.mxu0 0
        %2634 = vmatprep.subr.bf16.mxu0 0
        %2635 = vmatpush1.bf16.msra.mxu0 0
        %2636 = vmatprep.subr.bf16.mxu0 0
        %2637 = vmatpush1.bf16.msra.mxu0 0
        %2638 = vmatprep.subr.bf16.mxu0 0
        %2639 = vmatpush1.bf16.msra.mxu0 0
        %2640 = vmatprep.mubr.bf16.mxu0 0
        %2641 = vmatmul.mubr.bf16.gmra.mrb[0].mxu0 %v2319
        %v2642 = vpop.f32.mrb[0].mxu0
        %v2643 = vadd.f32 0.0, %v2642
        %v2644 = vpop.f32.mrb[0].mxu0
        %v2645 = vadd.f32 0.0, %v2644
        %v2646 = vpop.f32.mrb[0].mxu0
        %v2647 = vpop.f32.mrb[0].mxu0
        %2648 = vdwg.mxu0
        %v2649 = vadd.f32 %v2356, %v2358
        %v2650 = vadd.f32 %v2649, %v2397
        %v2651 = vadd.f32 %v2650, %v2399
        %v2652 = vadd.f32 %v2651, %v2438
        %v2653 = vadd.f32 %v2652, %v2440
        %v2654 = vadd.f32 %v2653, %v2479
        %v2655 = vadd.f32 %v2654, %v2481
        %v2656 = vadd.f32 %v2655, %v2520
        %v2657 = vadd.f32 %v2656, %v2522
        %v2658 = vadd.f32 %v2657, %v2561
        %v2659 = vadd.f32 %v2658, %v2563
        %v2660 = vadd.f32 %v2659, %v2602
        %v2661 = vadd.f32 %v2660, %v2604
        %v2662 = vadd.f32 %v2661, %v2643
        %v2663 = vadd.f32 %v2662, %v2645
        %v2664 = vmul.f32 %v1711, 16.0
        %2666 = vset.pattern.permute.xlu0 0
        %2667 = vperm.xlu0 %2666, %v2664
        %v2668 = vpop.permute.xlu0 %2667
        %v2670 = vadd.f32 %v1747, %v2668
        %v2672 = vrot.slane %v2670, 4
        %vm2674 = vcmask 1043456
        %v2675 = vsel %vm2674, %v2672, 0.0
        %v2676 = vld [vmem:[%s4] sm:$0xff]
        %v2677 = vmul.f32 %v2676, 16.0
        %2679 = vset.pattern.permute.xlu0 0
        %2680 = vperm.xlu0 %2679, %v2677
        %v2681 = vpop.permute.xlu0 %2680
        %v2683 = vadd.f32 %v2663, %v2681
        %2684 = vst [vmem:[%s240] sm:$0xff] %v2675
        %2685 = vst [vmem:[%s240 + $0x8] sm:$0xff] %v2683
        %s2686 = sand.u32 %s140, 1
        %s2687 = scalar_lea.sflag [#allocation4], %s2686
        %s2688 = sand.u32 %s140, 1
        %s2689 = smul.addr %s2688, 16
        %s2690 = scalar_lea.vmem [#allocation5], %s2689
        // Predicated region
        $region45: #{tpu_custom_call.1} parent=39 // pred_check
          %p2691 = pneg %p150
        $region46: #{tpu_custom_call.1} parent=39 // pred_check_branch
          %2693 = sbr.rel (%p2691) target = $region48
        $region47: #{tpu_custom_call.1} parent=39 // pred_region
          %s2695 = ssub.s32 256, 256
          %2696 = vsyncadd %s2687, %s2695
          %s2697 = smul.addr %s22, 128
          %s2698 = scalar_lea.hbm %s5, %s2697
          %s2699 = sshll.u32 %s2690, 4
          %s2700 = int_to_ptr.vmem [resolvable:$true] %s2699
          %2705 = dma.vmem_to_hbm [thread:$0]  %s2700, 256, %s2698, %s2687, 128, 256, 8
        $region48: #{tpu_custom_call.1} parent=39 // pred_fallthru
          _
      $region40: #{tpu_custom_call.1} parent=5 // pred_fallthru
        _
      %p2706 = scmp.le.s32.totalorder 2, %s17
      // Predicated region
      $region49: #{tpu_custom_call.1} parent=5 // pred_check
        %p2707 = pneg %p2706
      $region50: #{tpu_custom_call.1} parent=5 // pred_check_branch
        %2709 = sbr.rel (%p2707) target = $region52
      $region51: #{tpu_custom_call.1} parent=5 // pred_region
        %s2710 = ssub.s32 %s17, 2
        // Predicated region
        $region53: #{tpu_custom_call.1} parent=51 // pred_check
          %p2711 = pneg %p156
        $region54: #{tpu_custom_call.1} parent=51 // pred_check_branch
          %2713 = sbr.rel (%p2711) target = $region56
        $region55: #{tpu_custom_call.1} parent=51 // pred_region
          %s2714 = sand.u32 %s141, 1
          %s2715 = scalar_lea.sflag [#allocation4], %s2714
          %s2716 = sand.u32 %s141, 1
          %s2717 = smul.addr %s2716, 16
          %s2718 = scalar_lea.vmem [#allocation5], %s2717
          %2719 = dma.done %s2715, 256
        $region56: #{tpu_custom_call.1} parent=51 // pred_fallthru
          _
      $region52: #{tpu_custom_call.1} parent=5 // pred_fallthru
        _
    $region6: #{tpu_custom_call.1} parent=1 // loop_footer
      %s21 = sadd.s32 1, %s17
    $region7: #{tpu_custom_call.1} parent=1 // loop_footer_branch
      %16 = sbr.rel target = $region3
    $region8: #{tpu_custom_call.1} parent=1 // loop_exit
      _
    %2720 = vsyncpa [#allocation3], 1
    %s2721 = scalar_lea.sflag [#allocation3], 1
    %2722 = vsyncpa %s2721, 1
    %2723 = vsyncpa [#allocation4], 1
    %s2724 = scalar_lea.sflag [#allocation4], 1
    %2725 = vsyncpa %s2724, 1

</llo_original>
